<compile_context>
chip_gen: v7x
topology: tpu7x:2x2x1
jax: 0.10.0
libtpu: 0.0.40
codegen_flags: <defaults>
</compile_context>

<pallas_src>
import math
import functools

import jax
import jax.numpy as jnp
import numpy as np
from jax import lax
from jax.experimental import pallas as pl
from jax.experimental.pallas import tpu as pltpu

SQRT_4PI = math.sqrt(4.0 * math.pi)


# ----------------------------------------------------------------------------
# Fused kernel: interpolation + 2x Chebyshev graph conv + SHC head (per batch)
# ----------------------------------------------------------------------------
def _fused_deconv_kernel(x_ref, mcat_ref, tcat_ref, w1t_ref, b1_ref,
                         w2t_ref, b2_ref, s2sh_ref, out_ref, *,
                         cin, vp, K, n_equi, n_inva, csh, slab_w,
                         normalize, eps):
    f32 = jnp.float32
    x = x_ref[0].astype(f32)                                     # [Cin, Vp] (channel-major)

    # ---- Stage 1: interpolation as ONE lane-dense MXU matmul ----------------
    # xblk[c, c'*Vp + p] = x[c, p] * (c == c')   (block-diagonal embedding)
    row_ids = lax.broadcasted_iota(jnp.int32, (cin, vp), 0)      # [Cin, Vp]
    blocks = [jnp.where(row_ids == c, x, 0.0) for c in range(cin)]
    xblk = blocks[0] if cin == 1 else jnp.concatenate(blocks, axis=1)   # [Cin, Cin*Vp]
    h = jnp.dot(xblk, mcat_ref[...].astype(f32),
                preferred_element_type=f32)                       # [Cin, V]

    tcat = tcat_ref[...].astype(f32)                              # [K*V, V] (stacked T_k^T)

    # ---- Stage 2: Chebyshev layers: K tiny dots + one deep-contraction dot --
    def cheb_layer(xin_cm, wt_ref, b_ref, relu):
        # xin_cm: [Fin, V]; wt_ref: [K, Fout, Fin]; b_ref: [Fout, 1]
        zs = [jnp.dot(wt_ref[kk].astype(f32), xin_cm,
                      preferred_element_type=f32) for kk in range(K)]   # each [Fout, V]
        zcat = zs[0] if K == 1 else jnp.concatenate(zs, axis=1)         # [Fout, K*V]
        y = jnp.dot(zcat, tcat, preferred_element_type=f32)             # [Fout, V]
        y = y + b_ref[...].astype(f32)
        return jnp.maximum(y, 0.0) if relu else y

    h1 = cheb_layer(h, w1t_ref, b1_ref, relu=True)                # [F1, V]
    h2 = cheb_layer(h1, w2t_ref, b2_ref, relu=False)              # [Cout, V]

    # ---- Stage 3: separate() + ComputeSHC + invariant max + norm() ----------
    x_equi = h2[:n_equi, :]                                       # [n_equi, V]
    x_inva = h2[n_equi:, :]                                       # [n_inva, V]

    equi_shc = jnp.dot(x_equi, s2sh_ref[...].astype(f32),
                       preferred_element_type=f32)                # [n_equi, Csh]
    inva_shc = jnp.max(x_inva, axis=1, keepdims=True) * SQRT_4PI  # [n_inva, 1]

    if normalize:
        to_norm = jnp.sum(equi_shc[:, 0:1]) + jnp.sum(inva_shc)
        to_norm = to_norm * SQRT_4PI + eps
        equi_shc = equi_shc / to_norm
        inva_shc = inva_shc / to_norm

    # ---- Pack into one lane-dense [Cout, slab_w] output slab ----------------
    equi_row = equi_shc
    if csh < slab_w:
        equi_row = jnp.concatenate(
            [equi_shc, jnp.zeros((n_equi, slab_w - csh), f32)], axis=1)
    inva_row = inva_shc
    if slab_w > 1:
        inva_row = jnp.concatenate(
            [inva_shc, jnp.zeros((n_inva, slab_w - 1), f32)], axis=1)
    out_ref[0] = jnp.concatenate([equi_row, inva_row], axis=0).astype(out_ref.dtype)


def fused_deconvolution(x, mcat, tcat, w1t, b1, w2t, b2, s2sh, *,
                        n_equi, n_inva, csh, slab_w, normalize, eps):
    B, cin, vp = x.shape
    V = tcat.shape[1]
    K, f1, _ = w1t.shape
    cout = w2t.shape[1]

    kernel = functools.partial(
        _fused_deconv_kernel, cin=cin, vp=vp, K=K,
        n_equi=n_equi, n_inva=n_inva, csh=csh, slab_w=slab_w,
        normalize=normalize, eps=eps)

    slab = pl.pallas_call(
        kernel,
        out_shape=jax.ShapeDtypeStruct((B, cout, slab_w), jnp.float32),
        grid=(B,),
        in_specs=[
            pl.BlockSpec((1, cin, vp), lambda b: (b, 0, 0)),       # x (per batch)
            pl.BlockSpec((cin * vp, V), lambda b: (0, 0)),         # interp mcat (const)
            pl.BlockSpec((K * V, V), lambda b: (0, 0)),            # T_k stack (const)
            pl.BlockSpec((K, f1, cin), lambda b: (0, 0, 0)),       # W1^T
            pl.BlockSpec((f1, 1), lambda b: (0, 0)),               # b1 (channel-major)
            pl.BlockSpec((K, cout, f1), lambda b: (0, 0, 0)),      # W2^T
            pl.BlockSpec((cout, 1), lambda b: (0, 0)),             # b2
            pl.BlockSpec((V, csh), lambda b: (0, 0)),              # S2SH
        ],
        out_specs=pl.BlockSpec((1, cout, slab_w), lambda b: (b, 0, 0)),
        compiler_params=pltpu.CompilerParams(
            dimension_semantics=("parallel",)),
    )(x, mcat, tcat, w1t, b1, w2t, b2, s2sh)

    equi = slab[:, :n_equi, :csh]
    inva = slab[:, n_equi:, :1]
    return equi, inva


# ----------------------------------------------------------------------------
# Module wrapper with deterministic synthetic parameters
# ----------------------------------------------------------------------------
class DeconvolutionPallas:
    def __init__(self, key, *, in_channels, n_v_in, n_v, filter_start,
                 kernel_size, n_equi, n_inva, n_sh, normalize):
        assert n_equi > 0 and n_inva > 0  # TODO(synk): n_equi==0 / n_inva==0 branches not exercised
        assert n_sh <= 128
        self.n_equi = n_equi
        self.n_inva = n_inva
        self.normalize = normalize
        self.eps = 1e-16
        self.csh = n_sh
        self.slab_w = max(128, ((n_sh + 127) // 128) * 128)
        out_channels = n_equi + n_inva

        k0, k1, k2, k3, k4, k5 = jax.random.split(key, 6)

        # Interpolation matrices (stand-in for SH-based shell interpolation):
        # nonnegative, row-normalized, one per input shell/channel.
        m = jnp.abs(jax.random.normal(k0, (in_channels, n_v, n_v_in), jnp.float32))
        self.interp = m / jnp.sum(m, axis=-1, keepdims=True)

        # Rescaled symmetric graph Laplacian of a ring graph on V vertices
        # (eigenvalues in [-1, 1]), used by every Chebyshev layer.
        eye = jnp.eye(n_v, dtype=jnp.float32)
        adj = jnp.roll(eye, 1, axis=1) + jnp.roll(eye, -1, axis=1)
        self.lap = -0.5 * adj

        # GraphCNNUnet stand-in: two Chebyshev graph-conv layers.
        self.w1 = 0.1 * jax.random.normal(k1, (kernel_size, in_channels, filter_start), jnp.float32)
        self.b1 = 0.1 * jax.random.normal(k2, (1, filter_start), jnp.float32)
        self.w2 = 0.1 * jax.random.normal(k3, (kernel_size, filter_start, out_channels), jnp.float32)
        self.b2 = 0.1 * jax.random.normal(k4, (1, out_channels), jnp.float32)

        # ComputeSHC projection matrix (graphSampling.sampling.S2SH), [V, C_sh].
        self.s2sh = jax.random.normal(k5, (n_v, n_sh), jnp.float32) / math.sqrt(n_v)

        # ---- Precomputed kernel-layout constants (static, built once) -------
        # mcat[c*Vp + p, v] = interp[c, v, p]
        self.mcat = jnp.transpose(self.interp, (0, 2, 1)).reshape(in_channels * n_v_in, n_v)
        # Chebyshev polynomial stack: tcat[k*V + u, v] = T_k(L)[v, u]
        T = [eye]
        if kernel_size > 1:
            T.append(self.lap)
        for _ in range(2, kernel_size):
            T.append(2.0 * self.lap @ T[-1] - T[-2])
        self.tcat = jnp.concatenate([t.T for t in T], axis=0)      # [K*V, V]
        # Channel-major weights/biases.
        self.w1t = jnp.transpose(self.w1, (0, 2, 1))               # [K, F1, Cin]
        self.b1_cm = self.b1.T                                      # [F1, 1]
        self.w2t = jnp.transpose(self.w2, (0, 2, 1))               # [K, Cout, F1]
        self.b2_cm = self.b2.T                                      # [Cout, 1]

    def __call__(self, x):
        # x: [B, in_channels, V']  (PyTorch layout, already channel-major)
        return fused_deconvolution(
            x, self.mcat, self.tcat, self.w1t, self.b1_cm, self.w2t, self.b2_cm,
            self.s2sh, n_equi=self.n_equi, n_inva=self.n_inva, csh=self.csh,
            slab_w=self.slab_w, normalize=self.normalize, eps=self.eps)


# ----------------------------------------------------------------------------
# Pure-JAX reference (mirrors the PyTorch forward semantics for this config)
# ----------------------------------------------------------------------------
def reference_forward(model, x):
    hi = jax.lax.Precision.HIGHEST
    xt = jnp.transpose(x, (0, 2, 1))
    y = jnp.einsum("cvp,bpc->bvc", model.interp, xt, precision=hi)

    def cheb_ref(xin, L, W, b, relu):
        K = W.shape[0]
        terms = [xin]
        if K > 1:
            terms.append(jnp.einsum("vu,buf->bvf", L, xin, precision=hi))
        for _ in range(2, K):
            terms.append(2.0 * jnp.einsum("vu,buf->bvf", L, terms[-1], precision=hi)
                         - terms[-2])
        out = sum(jnp.einsum("bvf,fg->bvg", t, W[k], precision=hi)
                  for k, t in enumerate(terms)) + b
        return jnp.maximum(out, 0.0) if relu else out

    h = cheb_ref(y, model.lap, model.w1, model.b1, True)
    z = cheb_ref(h, model.lap, model.w2, model.b2, False)        # [B, V, Cout]

    x_equi = z[:, :, :model.n_equi]                              # [B, V, n_equi]
    x_inva = jnp.max(z[:, :, model.n_equi:], axis=1)             # [B, n_inva]
    equi_shc = jnp.einsum("bve,vs->bes", x_equi, model.s2sh, precision=hi)
    inva_shc = (x_inva * SQRT_4PI)[:, :, None]
    if model.normalize:
        to_norm = (jnp.sum(equi_shc[:, :, 0:1], axis=1, keepdims=True)
                   + jnp.sum(inva_shc, axis=1, keepdims=True))
        to_norm = to_norm * SQRT_4PI + model.eps
        equi_shc = equi_shc / to_norm
        inva_shc = inva_shc / to_norm
    return equi_shc, inva_shc


if __name__ == "__main__":
    B, Cin, Vp = 2, 3, 64          # batch, input shells, input sampling points
    V, Csh = 128, 15               # graph vertices, SH coefficients
    filter_start, kernel_size = 8, 3
    n_equi, n_inva = 2, 2

    key = jax.random.PRNGKey(0)
    k_model, k_x = jax.random.split(key)
    model = DeconvolutionPallas(
        k_model, in_channels=Cin, n_v_in=Vp, n_v=V, filter_start=filter_start,
        kernel_size=kernel_size, n_equi=n_equi, n_inva=n_inva, n_sh=Csh,
        normalize=True)

    x = jax.random.normal(k_x, (B, Cin, Vp), jnp.float32)

    equi_shc, inva_shc = model(x)
    jax.block_until_ready((equi_shc, inva_shc))

    ref_equi, ref_inva = reference_forward(model, x)
    assert equi_shc.shape == (B, n_equi, Csh) and inva_shc.shape == (B, n_inva, 1)
    np.testing.assert_allclose(np.asarray(equi_shc), np.asarray(ref_equi),
                               rtol=1e-2, atol=1e-2)
    np.testing.assert_allclose(np.asarray(inva_shc), np.asarray(ref_inva),
                               rtol=1e-2, atol=1e-2)
    print("KERNEL_OK")
</pallas_src>

<mosaic_0001>
module attributes {stable_mosaic.version = 11 : i64} {
  func.func @_fused_deconv_kernel(%arg0: i32, %arg1: memref<1x3x64xf32, #tpu.memory_space<vmem>>, %arg2: memref<192x128xf32, #tpu.memory_space<vmem>>, %arg3: memref<384x128xf32, #tpu.memory_space<vmem>>, %arg4: memref<3x8x3xf32, #tpu.memory_space<vmem>>, %arg5: memref<8x1xf32, #tpu.memory_space<vmem>>, %arg6: memref<3x4x8xf32, #tpu.memory_space<vmem>>, %arg7: memref<4x1xf32, #tpu.memory_space<vmem>>, %arg8: memref<128x15xf32, #tpu.memory_space<vmem>>, %arg9: memref<1x4x128xf32, #tpu.memory_space<vmem>>) attributes {dimension_semantics = [#tpu.dimension_semantics<parallel>], iteration_bounds = array<i64: 2>, scalar_prefetch = 0 : i64, scratch_operands = 0 : i64, tpu.core_type = #tpu.core_type<tc>, window_params = [{transform_indices = @transform_0, window_bounds = array<i64: 1, 3, 64>}, {pipeline_mode = #tpu.pipeline_mode<synchronous>, transform_indices = @transform_1, window_bounds = array<i64: 192, 128>}, {pipeline_mode = #tpu.pipeline_mode<synchronous>, transform_indices = @transform_2, window_bounds = array<i64: 384, 128>}, {pipeline_mode = #tpu.pipeline_mode<synchronous>, transform_indices = @transform_3, window_bounds = array<i64: 3, 8, 3>}, {pipeline_mode = #tpu.pipeline_mode<synchronous>, transform_indices = @transform_4, window_bounds = array<i64: 8, 1>}, {pipeline_mode = #tpu.pipeline_mode<synchronous>, transform_indices = @transform_5, window_bounds = array<i64: 3, 4, 8>}, {pipeline_mode = #tpu.pipeline_mode<synchronous>, transform_indices = @transform_6, window_bounds = array<i64: 4, 1>}, {pipeline_mode = #tpu.pipeline_mode<synchronous>, transform_indices = @transform_7, window_bounds = array<i64: 128, 15>}, {transform_indices = @transform_8, window_bounds = array<i64: 1, 4, 128>}]} {
    %c0 = arith.constant 0 : index
    %c0_0 = arith.constant 0 : index
    %c0_1 = arith.constant 0 : index
    %0 = vector.load %arg1[%c0, %c0_0, %c0_1] : memref<1x3x64xf32, #tpu.memory_space<vmem>>, vector<1x3x64xf32>
    %1 = vector.shape_cast %0 : vector<1x3x64xf32> to vector<3x64xf32>
    %2 = tpu.iota {dimensions = array<i32: 0>} : vector<3x64xi32>
    %c0_i32 = arith.constant 0 : i32
    %3 = vector.broadcast %c0_i32 : i32 to vector<3x64xi32>
    %4 = arith.cmpi eq, %2, %3 : vector<3x64xi32>
    %cst = arith.constant 0.000000e+00 : f32
    %5 = vector.broadcast %cst : f32 to vector<3x64xf32>
    %6 = arith.select %4, %1, %5 : vector<3x64xi1>, vector<3x64xf32>
    %c1_i32 = arith.constant 1 : i32
    %7 = vector.broadcast %c1_i32 : i32 to vector<3x64xi32>
    %8 = arith.cmpi eq, %2, %7 : vector<3x64xi32>
    %cst_2 = arith.constant 0.000000e+00 : f32
    %9 = vector.broadcast %cst_2 : f32 to vector<3x64xf32>
    %10 = arith.select %8, %1, %9 : vector<3x64xi1>, vector<3x64xf32>
    %c2_i32 = arith.constant 2 : i32
    %11 = vector.broadcast %c2_i32 : i32 to vector<3x64xi32>
    %12 = arith.cmpi eq, %2, %11 : vector<3x64xi32>
    %cst_3 = arith.constant 0.000000e+00 : f32
    %13 = vector.broadcast %cst_3 : f32 to vector<3x64xf32>
    %14 = arith.select %12, %1, %13 : vector<3x64xi1>, vector<3x64xf32>
    %15 = tpu.concatenate %6, %10, %14 in 1 : vector<3x64xf32>, vector<3x64xf32>, vector<3x64xf32> -> vector<3x192xf32>
    %c0_4 = arith.constant 0 : index
    %c0_5 = arith.constant 0 : index
    %16 = vector.load %arg2[%c0_4, %c0_5] : memref<192x128xf32, #tpu.memory_space<vmem>>, vector<192x128xf32>
    %cst_6 = arith.constant dense<0.000000e+00> : vector<3x128xf32>
    %17 = tpu.matmul %15, %16, %cst_6 {dimension_numbers = #tpu.dot_dimension_numbers<[1], [0], [0], [1], [0, 0, 1, 1], [], []>} : vector<3x192xf32>, vector<192x128xf32>, vector<3x128xf32> -> vector<3x128xf32>
    %c0_7 = arith.constant 0 : index
    %c0_8 = arith.constant 0 : index
    %18 = vector.load %arg3[%c0_7, %c0_8] : memref<384x128xf32, #tpu.memory_space<vmem>>, vector<384x128xf32>
    %c0_9 = arith.constant 0 : index
    %c0_10 = arith.constant 0 : index
    %c0_11 = arith.constant 0 : index
    %19 = vector.load %arg4[%c0_9, %c0_10, %c0_11] : memref<3x8x3xf32, #tpu.memory_space<vmem>>, vector<1x8x3xf32>
    %20 = vector.shape_cast %19 : vector<1x8x3xf32> to vector<8x3xf32>
    %cst_12 = arith.constant dense<0.000000e+00> : vector<8x128xf32>
    %21 = tpu.matmul %20, %17, %cst_12 {dimension_numbers = #tpu.dot_dimension_numbers<[1], [0], [0], [1], [0, 0, 1, 1], [], []>} : vector<8x3xf32>, vector<3x128xf32>, vector<8x128xf32> -> vector<8x128xf32>
    %c1 = arith.constant 1 : index
    %c0_13 = arith.constant 0 : index
    %c0_14 = arith.constant 0 : index
    %22 = vector.load %arg4[%c1, %c0_13, %c0_14] : memref<3x8x3xf32, #tpu.memory_space<vmem>>, vector<1x8x3xf32>
    %23 = vector.shape_cast %22 : vector<1x8x3xf32> to vector<8x3xf32>
    %cst_15 = arith.constant dense<0.000000e+00> : vector<8x128xf32>
    %24 = tpu.matmul %23, %17, %cst_15 {dimension_numbers = #tpu.dot_dimension_numbers<[1], [0], [0], [1], [0, 0, 1, 1], [], []>} : vector<8x3xf32>, vector<3x128xf32>, vector<8x128xf32> -> vector<8x128xf32>
    %c2 = arith.constant 2 : index
    %c0_16 = arith.constant 0 : index
    %c0_17 = arith.constant 0 : index
    %25 = vector.load %arg4[%c2, %c0_16, %c0_17] : memref<3x8x3xf32, #tpu.memory_space<vmem>>, vector<1x8x3xf32>
    %26 = vector.shape_cast %25 : vector<1x8x3xf32> to vector<8x3xf32>
    %cst_18 = arith.constant dense<0.000000e+00> : vector<8x128xf32>
    %27 = tpu.matmul %26, %17, %cst_18 {dimension_numbers = #tpu.dot_dimension_numbers<[1], [0], [0], [1], [0, 0, 1, 1], [], []>} : vector<8x3xf32>, vector<3x128xf32>, vector<8x128xf32> -> vector<8x128xf32>
    %28 = tpu.concatenate %21, %24, %27 in 1 : vector<8x128xf32>, vector<8x128xf32>, vector<8x128xf32> -> vector<8x384xf32>
    %cst_19 = arith.constant dense<0.000000e+00> : vector<8x128xf32>
    %29 = tpu.matmul %28, %18, %cst_19 {dimension_numbers = #tpu.dot_dimension_numbers<[1], [0], [0], [1], [0, 0, 1, 1], [], []>} : vector<8x384xf32>, vector<384x128xf32>, vector<8x128xf32> -> vector<8x128xf32>
    %c0_20 = arith.constant 0 : index
    %c0_21 = arith.constant 0 : index
    %30 = vector.load %arg5[%c0_20, %c0_21] : memref<8x1xf32, #tpu.memory_space<vmem>>, vector<8x1xf32>
    %31 = vector.broadcast %30 : vector<8x1xf32> to vector<8x128xf32>
    %32 = arith.addf %29, %31 : vector<8x128xf32>
    %cst_22 = arith.constant 0.000000e+00 : f32
    %33 = vector.broadcast %cst_22 : f32 to vector<8x128xf32>
    %34 = arith.maximumf %32, %33 : vector<8x128xf32>
    %c0_23 = arith.constant 0 : index
    %c0_24 = arith.constant 0 : index
    %c0_25 = arith.constant 0 : index
    %35 = vector.load %arg6[%c0_23, %c0_24, %c0_25] : memref<3x4x8xf32, #tpu.memory_space<vmem>>, vector<1x4x8xf32>
    %36 = vector.shape_cast %35 : vector<1x4x8xf32> to vector<4x8xf32>
    %cst_26 = arith.constant dense<0.000000e+00> : vector<4x128xf32>
    %37 = tpu.matmul %36, %34, %cst_26 {dimension_numbers = #tpu.dot_dimension_numbers<[1], [0], [0], [1], [0, 0, 1, 1], [], []>} : vector<4x8xf32>, vector<8x128xf32>, vector<4x128xf32> -> vector<4x128xf32>
    %c1_27 = arith.constant 1 : index
    %c0_28 = arith.constant 0 : index
    %c0_29 = arith.constant 0 : index
    %38 = vector.load %arg6[%c1_27, %c0_28, %c0_29] : memref<3x4x8xf32, #tpu.memory_space<vmem>>, vector<1x4x8xf32>
    %39 = vector.shape_cast %38 : vector<1x4x8xf32> to vector<4x8xf32>
    %cst_30 = arith.constant dense<0.000000e+00> : vector<4x128xf32>
    %40 = tpu.matmul %39, %34, %cst_30 {dimension_numbers = #tpu.dot_dimension_numbers<[1], [0], [0], [1], [0, 0, 1, 1], [], []>} : vector<4x8xf32>, vector<8x128xf32>, vector<4x128xf32> -> vector<4x128xf32>
    %c2_31 = arith.constant 2 : index
    %c0_32 = arith.constant 0 : index
    %c0_33 = arith.constant 0 : index
    %41 = vector.load %arg6[%c2_31, %c0_32, %c0_33] : memref<3x4x8xf32, #tpu.memory_space<vmem>>, vector<1x4x8xf32>
    %42 = vector.shape_cast %41 : vector<1x4x8xf32> to vector<4x8xf32>
    %cst_34 = arith.constant dense<0.000000e+00> : vector<4x128xf32>
    %43 = tpu.matmul %42, %34, %cst_34 {dimension_numbers = #tpu.dot_dimension_numbers<[1], [0], [0], [1], [0, 0, 1, 1], [], []>} : vector<4x8xf32>, vector<8x128xf32>, vector<4x128xf32> -> vector<4x128xf32>
    %44 = tpu.concatenate %37, %40, %43 in 1 : vector<4x128xf32>, vector<4x128xf32>, vector<4x128xf32> -> vector<4x384xf32>
    %cst_35 = arith.constant dense<0.000000e+00> : vector<4x128xf32>
    %45 = tpu.matmul %44, %18, %cst_35 {dimension_numbers = #tpu.dot_dimension_numbers<[1], [0], [0], [1], [0, 0, 1, 1], [], []>} : vector<4x384xf32>, vector<384x128xf32>, vector<4x128xf32> -> vector<4x128xf32>
    %c0_36 = arith.constant 0 : index
    %c0_37 = arith.constant 0 : index
    %46 = vector.load %arg7[%c0_36, %c0_37] : memref<4x1xf32, #tpu.memory_space<vmem>>, vector<4x1xf32>
    %47 = vector.broadcast %46 : vector<4x1xf32> to vector<4x128xf32>
    %48 = arith.addf %45, %47 : vector<4x128xf32>
    %49 = vector.extract_strided_slice %48 {offsets = [0, 0], sizes = [2, 128], strides = [1, 1]} : vector<4x128xf32> to vector<2x128xf32>
    %50 = vector.extract_strided_slice %48 {offsets = [2, 0], sizes = [2, 128], strides = [1, 1]} : vector<4x128xf32> to vector<2x128xf32>
    %c0_38 = arith.constant 0 : index
    %c0_39 = arith.constant 0 : index
    %51 = vector.load %arg8[%c0_38, %c0_39] : memref<128x15xf32, #tpu.memory_space<vmem>>, vector<128x15xf32>
    %cst_40 = arith.constant dense<0.000000e+00> : vector<2x15xf32>
    %52 = tpu.matmul %49, %51, %cst_40 {dimension_numbers = #tpu.dot_dimension_numbers<[1], [0], [0], [1], [0, 0, 1, 1], [], []>} : vector<2x128xf32>, vector<128x15xf32>, vector<2x15xf32> -> vector<2x15xf32>
    %cst_41 = arith.constant dense<0xFF800000> : vector<2xf32>
    %53 = vector.multi_reduction <maximumf>, %50, %cst_41 [1] : vector<2x128xf32> to vector<2xf32>
    %54 = vector.shape_cast %53 : vector<2xf32> to vector<2x1xf32>
    %cst_42 = arith.constant 3.54490781 : f32
    %55 = vector.broadcast %cst_42 : f32 to vector<2x1xf32>
    %56 = arith.mulf %54, %55 : vector<2x1xf32>
    %57 = vector.extract_strided_slice %52 {offsets = [0, 0], sizes = [2, 1], strides = [1, 1]} : vector<2x15xf32> to vector<2x1xf32>
    %58 = vector.shape_cast %57 : vector<2x1xf32> to vector<1x2x1xf32>
    %cst_43 = arith.constant dense<0.000000e+00> : vector<1xf32>
    %59 = vector.multi_reduction <add>, %58, %cst_43 [1, 2] : vector<1x2x1xf32> to vector<1xf32>
    %60 = vector.shape_cast %59 : vector<1xf32> to vector<1x1x1xf32>
    %61 = vector.extract %60[0, 0, 0] : f32 from vector<1x1x1xf32>
    %62 = vector.shape_cast %56 : vector<2x1xf32> to vector<1x2x1xf32>
    %cst_44 = arith.constant dense<0.000000e+00> : vector<1xf32>
    %63 = vector.multi_reduction <add>, %62, %cst_44 [1, 2] : vector<1x2x1xf32> to vector<1xf32>
    %64 = vector.shape_cast %63 : vector<1xf32> to vector<1x1x1xf32>
    %65 = vector.extract %64[0, 0, 0] : f32 from vector<1x1x1xf32>
    %66 = arith.addf %61, %65 : f32
    %cst_45 = arith.constant 3.54490781 : f32
    %67 = arith.mulf %66, %cst_45 : f32
    %cst_46 = arith.constant 1.000000e-16 : f32
    %68 = arith.addf %67, %cst_46 : f32
    %69 = vector.broadcast %68 : f32 to vector<2x15xf32>
    %70 = arith.divf %52, %69 : vector<2x15xf32>
    %71 = vector.broadcast %68 : f32 to vector<2x1xf32>
    %72 = arith.divf %56, %71 : vector<2x1xf32>
    %cst_47 = arith.constant 0.000000e+00 : f32
    %73 = vector.broadcast %cst_47 : f32 to vector<2x113xf32>
    %74 = tpu.concatenate %70, %73 in 1 : vector<2x15xf32>, vector<2x113xf32> -> vector<2x128xf32>
    %cst_48 = arith.constant 0.000000e+00 : f32
    %75 = vector.broadcast %cst_48 : f32 to vector<2x127xf32>
    %76 = tpu.concatenate %72, %75 in 1 : vector<2x1xf32>, vector<2x127xf32> -> vector<2x128xf32>
    %77 = tpu.concatenate %74, %76 in 0 : vector<2x128xf32>, vector<2x128xf32> -> vector<4x128xf32>
    %c0_49 = arith.constant 0 : index
    %c0_50 = arith.constant 0 : index
    %c0_51 = arith.constant 0 : index
    %78 = vector.load %arg9[%c0_49, %c0_50, %c0_51] : memref<1x4x128xf32, #tpu.memory_space<vmem>>, vector<1x4x128xf32>
    %79 = vector.shape_cast %78 : vector<1x4x128xf32> to vector<4x128xf32>
    %80 = vector.shape_cast %77 : vector<4x128xf32> to vector<1x4x128xf32>
    tpu.vector_store %arg9[%c0_49, %c0_50, %c0_51], %80 {strides = array<i32>} : memref<1x4x128xf32, #tpu.memory_space<vmem>>, vector<1x4x128xf32>,
    return
  }
  func.func @transform_0(%arg0: i32) -> (i32, i32, i32) {
    %c0_i32 = arith.constant 0 : i32
    %c0_i32_0 = arith.constant 0 : i32
    %c0_i32_1 = arith.constant 0 : i32
    return %arg0, %c0_i32, %c0_i32_0 : i32, i32, i32
  }
  func.func @transform_1(%arg0: i32) -> (i32, i32) {
    %c0_i32 = arith.constant 0 : i32
    %c0_i32_0 = arith.constant 0 : i32
    %c0_i32_1 = arith.constant 0 : i32
    return %c0_i32, %c0_i32_0 : i32, i32
  }
  func.func @transform_2(%arg0: i32) -> (i32, i32) {
    %c0_i32 = arith.constant 0 : i32
    %c0_i32_0 = arith.constant 0 : i32
    %c0_i32_1 = arith.constant 0 : i32
    return %c0_i32, %c0_i32_0 : i32, i32
  }
  func.func @transform_3(%arg0: i32) -> (i32, i32, i32) {
    %c0_i32 = arith.constant 0 : i32
    %c0_i32_0 = arith.constant 0 : i32
    %c0_i32_1 = arith.constant 0 : i32
    %c0_i32_2 = arith.constant 0 : i32
    return %c0_i32, %c0_i32_0, %c0_i32_1 : i32, i32, i32
  }
  func.func @transform_4(%arg0: i32) -> (i32, i32) {
    %c0_i32 = arith.constant 0 : i32
    %c0_i32_0 = arith.constant 0 : i32
    %c0_i32_1 = arith.constant 0 : i32
    return %c0_i32, %c0_i32_0 : i32, i32
  }
  func.func @transform_5(%arg0: i32) -> (i32, i32, i32) {
    %c0_i32 = arith.constant 0 : i32
    %c0_i32_0 = arith.constant 0 : i32
    %c0_i32_1 = arith.constant 0 : i32
    %c0_i32_2 = arith.constant 0 : i32
    return %c0_i32, %c0_i32_0, %c0_i32_1 : i32, i32, i32
  }
  func.func @transform_6(%arg0: i32) -> (i32, i32) {
    %c0_i32 = arith.constant 0 : i32
    %c0_i32_0 = arith.constant 0 : i32
    %c0_i32_1 = arith.constant 0 : i32
    return %c0_i32, %c0_i32_0 : i32, i32
  }
  func.func @transform_7(%arg0: i32) -> (i32, i32) {
    %c0_i32 = arith.constant 0 : i32
    %c0_i32_0 = arith.constant 0 : i32
    %c0_i32_1 = arith.constant 0 : i32
    return %c0_i32, %c0_i32_0 : i32, i32
  }
  func.func @transform_8(%arg0: i32) -> (i32, i32, i32) {
    %c0_i32 = arith.constant 0 : i32
    %c0_i32_0 = arith.constant 0 : i32
    %c0_i32_1 = arith.constant 0 : i32
    return %arg0, %c0_i32, %c0_i32_0 : i32, i32, i32
  }
}

</mosaic_0001>

<llo_original>
// kernel: tpu_custom_call.1
$region0: #{tpu_custom_call.1}
  #allocation0 [shape = 'u32[]', space=smem, size = 0x4, offset = 0x4, fixed_abs, tag = 'smem constant byte address 0x4 - core index']
  #allocation1 [shape = 'u32[144,128]{1,0:T(1,128)}', space=vmem, size = 0x12000, scoped, tag = 'internal scratch']
  %s0 = inlined_call_operand.vmem [shape: f32[2,3,64], index: 0, kind: input, shape index: {}]
  %s1 = inlined_call_operand.vmem [shape: f32[192,128], index: 1, kind: input, shape index: {}]
  %s2 = inlined_call_operand.hbm [shape: f32[384,128], index: 2, kind: input, shape index: {}]
  %s3 = inlined_call_operand.vmem [shape: f32[3,8,3], index: 3, kind: input, shape index: {}]
  %s4 = inlined_call_operand.vmem [shape: f32[8,1], index: 4, kind: input, shape index: {}]
  %s5 = inlined_call_operand.vmem [shape: f32[3,4,8], index: 5, kind: input, shape index: {}]
  %s6 = inlined_call_operand.vmem [shape: f32[4,1], index: 6, kind: input, shape index: {}]
  %s7 = inlined_call_operand.vmem [shape: f32[128,15], index: 7, kind: input, shape index: {}]
  %s8 = inlined_call_operand.hbm [shape: f32[2,4,128], index: 8, kind: output, shape index: {}]
  %s9 = sld [smem:[#allocation0]]
  $region69: #{tpu_custom_call.1} parent=0
    _
  %s11 = ssub.s32 1, %s9
  %s12 = scalar_select 0, %s11, %s9
  $region1: #{tpu_custom_call.1} parent=0
    #allocation2 [shape = 'u8[196608]{0}', space=vmem, size = 0x30000, scoped, tag = 'input window, operand 2, single buffered']
    #allocation3 [shape = 's32[2]{0}', space=sflag, size = 0x8, scoped, tag = 'scoped memory for tpu_custom_call.1']
    #allocation4 [shape = 's32[2]{0}', space=sflag, size = 0x8, scoped, tag = 'scoped memory for tpu_custom_call.1']
    #allocation5 [shape = 'u8[4096]{0}', space=vmem, size = 0x1000, scoped, tag = 'output window, operand 0']
    %13 = vsyncpa [#allocation3], 0
    %14 = vsyncpa [#allocation4], 0
    %s15 = scalar_lea.sflag [#allocation4], 1
    %16 = vsyncpa %s15, 0
    loop: start=0, step=1, limit=4
    $region2: #{tpu_custom_call.1} parent=1 // loop_pre_header
      _
    $region3: #{tpu_custom_call.1} parent=1 // loop_header
      %s18 = sphi 0, %s22
      %p19 = scmp.ge.s32.totalorder %s18, 4
      %s28 = sphi 0, %s30
      %s31 = sphi 0, %s28
      %s32 = sphi 0, %s31
      %s48 = sphi 0, %s32
      %s52 = sphi 0, %s52
      %s54 = sphi 0, %s52
      %s55 = sphi 0, %s54
      %s69 = sphi 0, %s55
      %s73 = sphi 0, %s73
      %s75 = sphi 0, %s73
      %s76 = sphi 0, %s75
      %s90 = sphi 0, %s76
      %s94 = sphi 0, %s94
      %s96 = sphi 0, %s94
      %s97 = sphi 0, %s96
      %s111 = sphi 0, %s97
      %s115 = sphi 0, %s115
      %s117 = sphi 0, %s115
      %s118 = sphi 0, %s117
      %s132 = sphi 0, %s118
      %s136 = sphi 0, %s136
      %s138 = sphi 0, %s136
      %s139 = sphi 0, %s138
      %s153 = sphi 0, %s139
      %s157 = sphi 0, %s157
      %s159 = sphi 0, %s157
      %s160 = sphi 0, %s159
      %s174 = sphi 0, %s160
      %s178 = sphi 0, %s178
      %s180 = sphi 0, %s178
      %s181 = sphi 0, %s180
      %s195 = sphi 0, %s181
      %s201 = sphi 0, %s203
      %s204 = sphi 0, %s201
      %s205 = sphi 0, %s204
      %s221 = sphi 0, %s205
    $region4: #{tpu_custom_call.1} parent=1 // loop_header_branch
      %21 = sbr.rel (%p19) target = $region8
    $region5: #{tpu_custom_call.1} parent=1 // loop_body
      %s23 = ssub.s32 %s18, 1
      %s24 = ssub.s32 %s18, 2
      %s25 = sadd.s32 %s18, 1
      %s26 = ssub.s32 %s18, %s25
      %p27 = scmp.eq.s32.totalorder %s26, 0
      %s29 = sadd.s32 %s28, 1
      %s30 = scalar_select %p27, %s28, %s29
      %p33 = pneg %p27
      %p34 = scmp.eq.s32.totalorder %s18, 1
      %p35 = por %p33, %p34
      %p36 = scmp.ne.s32.totalorder %s28, %s31
      %p37 = scmp.eq.s32.totalorder %s18, 0
      %p38 = por %p36, %p37
      %p39 = scmp.ne.s32.totalorder %s28, %s31
      %p40 = scmp.eq.s32.totalorder %s23, 1
      %p41 = por %p39, %p40
      %p42 = scmp.ne.s32.totalorder %s31, %s32
      %p43 = scmp.eq.s32.totalorder %s23, 0
      %p44 = por %p42, %p43
      %p45 = scmp.ne.s32.totalorder %s31, %s32
      %p46 = scmp.eq.s32.totalorder %s24, 1
      %p47 = por %p45, %p46
      %p49 = scmp.ne.s32.totalorder %s32, %s48
      %p50 = scmp.eq.s32.totalorder %s24, 0
      %p51 = por %p49, %p50
      %s53 = sadd.s32 %s52, 1
      %p56 = scmp.eq.s32.totalorder %s18, 1
      %p57 = scmp.ne.s32.totalorder %s52, %s54
      %p58 = scmp.eq.s32.totalorder %s18, 0
      %p59 = por %p57, %p58
      %p60 = scmp.ne.s32.totalorder %s52, %s54
      %p61 = scmp.eq.s32.totalorder %s23, 1
      %p62 = por %p60, %p61
      %p63 = scmp.ne.s32.totalorder %s54, %s55
      %p64 = scmp.eq.s32.totalorder %s23, 0
      %p65 = por %p63, %p64
      %p66 = scmp.ne.s32.totalorder %s54, %s55
      %p67 = scmp.eq.s32.totalorder %s24, 1
      %p68 = por %p66, %p67
      %p70 = scmp.ne.s32.totalorder %s55, %s69
      %p71 = scmp.eq.s32.totalorder %s24, 0
      %p72 = por %p70, %p71
      %s74 = sadd.s32 %s73, 1
      %p77 = scmp.eq.s32.totalorder %s18, 1
      %p78 = scmp.ne.s32.totalorder %s73, %s75
      %p79 = scmp.eq.s32.totalorder %s18, 0
      %p80 = por %p78, %p79
      %p81 = scmp.ne.s32.totalorder %s73, %s75
      %p82 = scmp.eq.s32.totalorder %s23, 1
      %p83 = por %p81, %p82
      %p84 = scmp.ne.s32.totalorder %s75, %s76
      %p85 = scmp.eq.s32.totalorder %s23, 0
      %p86 = por %p84, %p85
      %p87 = scmp.ne.s32.totalorder %s75, %s76
      %p88 = scmp.eq.s32.totalorder %s24, 1
      %p89 = por %p87, %p88
      %p91 = scmp.ne.s32.totalorder %s76, %s90
      %p92 = scmp.eq.s32.totalorder %s24, 0
      %p93 = por %p91, %p92
      %s95 = sadd.s32 %s94, 1
      %p98 = scmp.eq.s32.totalorder %s18, 1
      %p99 = scmp.ne.s32.totalorder %s94, %s96
      %p100 = scmp.eq.s32.totalorder %s18, 0
      %p101 = por %p99, %p100
      %p102 = scmp.ne.s32.totalorder %s94, %s96
      %p103 = scmp.eq.s32.totalorder %s23, 1
      %p104 = por %p102, %p103
      %p105 = scmp.ne.s32.totalorder %s96, %s97
      %p106 = scmp.eq.s32.totalorder %s23, 0
      %p107 = por %p105, %p106
      %p108 = scmp.ne.s32.totalorder %s96, %s97
      %p109 = scmp.eq.s32.totalorder %s24, 1
      %p110 = por %p108, %p109
      %p112 = scmp.ne.s32.totalorder %s97, %s111
      %p113 = scmp.eq.s32.totalorder %s24, 0
      %p114 = por %p112, %p113
      %s116 = sadd.s32 %s115, 1
      %p119 = scmp.eq.s32.totalorder %s18, 1
      %p120 = scmp.ne.s32.totalorder %s115, %s117
      %p121 = scmp.eq.s32.totalorder %s18, 0
      %p122 = por %p120, %p121
      %p123 = scmp.ne.s32.totalorder %s115, %s117
      %p124 = scmp.eq.s32.totalorder %s23, 1
      %p125 = por %p123, %p124
      %p126 = scmp.ne.s32.totalorder %s117, %s118
      %p127 = scmp.eq.s32.totalorder %s23, 0
      %p128 = por %p126, %p127
      %p129 = scmp.ne.s32.totalorder %s117, %s118
      %p130 = scmp.eq.s32.totalorder %s24, 1
      %p131 = por %p129, %p130
      %p133 = scmp.ne.s32.totalorder %s118, %s132
      %p134 = scmp.eq.s32.totalorder %s24, 0
      %p135 = por %p133, %p134
      %s137 = sadd.s32 %s136, 1
      %p140 = scmp.eq.s32.totalorder %s18, 1
      %p141 = scmp.ne.s32.totalorder %s136, %s138
      %p142 = scmp.eq.s32.totalorder %s18, 0
      %p143 = por %p141, %p142
      %p144 = scmp.ne.s32.totalorder %s136, %s138
      %p145 = scmp.eq.s32.totalorder %s23, 1
      %p146 = por %p144, %p145
      %p147 = scmp.ne.s32.totalorder %s138, %s139
      %p148 = scmp.eq.s32.totalorder %s23, 0
      %p149 = por %p147, %p148
      %p150 = scmp.ne.s32.totalorder %s138, %s139
      %p151 = scmp.eq.s32.totalorder %s24, 1
      %p152 = por %p150, %p151
      %p154 = scmp.ne.s32.totalorder %s139, %s153
      %p155 = scmp.eq.s32.totalorder %s24, 0
      %p156 = por %p154, %p155
      %s158 = sadd.s32 %s157, 1
      %p161 = scmp.eq.s32.totalorder %s18, 1
      %p162 = scmp.ne.s32.totalorder %s157, %s159
      %p163 = scmp.eq.s32.totalorder %s18, 0
      %p164 = por %p162, %p163
      %p165 = scmp.ne.s32.totalorder %s157, %s159
      %p166 = scmp.eq.s32.totalorder %s23, 1
      %p167 = por %p165, %p166
      %p168 = scmp.ne.s32.totalorder %s159, %s160
      %p169 = scmp.eq.s32.totalorder %s23, 0
      %p170 = por %p168, %p169
      %p171 = scmp.ne.s32.totalorder %s159, %s160
      %p172 = scmp.eq.s32.totalorder %s24, 1
      %p173 = por %p171, %p172
      %p175 = scmp.ne.s32.totalorder %s160, %s174
      %p176 = scmp.eq.s32.totalorder %s24, 0
      %p177 = por %p175, %p176
      %s179 = sadd.s32 %s178, 1
      %p182 = scmp.eq.s32.totalorder %s18, 1
      %p183 = scmp.ne.s32.totalorder %s178, %s180
      %p184 = scmp.eq.s32.totalorder %s18, 0
      %p185 = por %p183, %p184
      %p186 = scmp.ne.s32.totalorder %s178, %s180
      %p187 = scmp.eq.s32.totalorder %s23, 1
      %p188 = por %p186, %p187
      %p189 = scmp.ne.s32.totalorder %s180, %s181
      %p190 = scmp.eq.s32.totalorder %s23, 0
      %p191 = por %p189, %p190
      %p192 = scmp.ne.s32.totalorder %s180, %s181
      %p193 = scmp.eq.s32.totalorder %s24, 1
      %p194 = por %p192, %p193
      %p196 = scmp.ne.s32.totalorder %s181, %s195
      %p197 = scmp.eq.s32.totalorder %s24, 0
      %p198 = por %p196, %p197
      %s199 = ssub.s32 %s18, %s25
      %p200 = scmp.eq.s32.totalorder %s199, 0
      %s202 = sadd.s32 %s201, 1
      %s203 = scalar_select %p200, %s201, %s202
      %p206 = pneg %p200
      %p207 = scmp.eq.s32.totalorder %s18, 1
      %p208 = por %p206, %p207
      %p209 = scmp.ne.s32.totalorder %s201, %s204
      %p210 = scmp.eq.s32.totalorder %s18, 0
      %p211 = por %p209, %p210
      %p212 = scmp.ne.s32.totalorder %s201, %s204
      %p213 = scmp.eq.s32.totalorder %s23, 1
      %p214 = por %p212, %p213
      %p215 = scmp.ne.s32.totalorder %s204, %s205
      %p216 = scmp.eq.s32.totalorder %s23, 0
      %p217 = por %p215, %p216
      %p218 = scmp.ne.s32.totalorder %s204, %s205
      %p219 = scmp.eq.s32.totalorder %s24, 1
      %p220 = por %p218, %p219
      %p222 = scmp.ne.s32.totalorder %s205, %s221
      %p223 = scmp.eq.s32.totalorder %s24, 0
      %p224 = por %p222, %p223
      %p225 = scmp.le.s32.totalorder 1, %s18
      %p226 = scmp.lt.s32.totalorder %s18, 3
      %p227 = pnand %p225, %p226
      %p228 = pneg %p227
      // Predicated region
      $region9: #{tpu_custom_call.1} parent=5 // pred_check
        _
      $region10: #{tpu_custom_call.1} parent=5 // pred_check_branch
        %230 = sbr.rel (%p227) target = $region12
      $region11: #{tpu_custom_call.1} parent=5 // pred_region
        %s231 = ssub.s32 %s18, 1
        // Predicated region
        $region13: #{tpu_custom_call.1} parent=11 // pred_check
          %p232 = pneg %p65
        $region14: #{tpu_custom_call.1} parent=11 // pred_check_branch
          %234 = sbr.rel (%p232) target = $region16
        $region15: #{tpu_custom_call.1} parent=11 // pred_region
          _
        $region16: #{tpu_custom_call.1} parent=11 // pred_fallthru
          _
        // Predicated region
        $region17: #{tpu_custom_call.1} parent=11 // pred_check
          %p235 = pneg %p86
        $region18: #{tpu_custom_call.1} parent=11 // pred_check_branch
          %237 = sbr.rel (%p235) target = $region20
        $region19: #{tpu_custom_call.1} parent=11 // pred_region
          %s239 = ssub.s32 6144, 6144
          %240 = vsyncadd [#allocation3], %s239
          %s241 = sshll.u32 [#allocation2], 4
          %s242 = int_to_ptr.vmem [resolvable:$true] %s241
          %247 = dma.hbm_to_vmem [thread:$0]  %s2, 6144, %s242, [#allocation3], 128, 128, 8
        $region20: #{tpu_custom_call.1} parent=11 // pred_fallthru
          _
        // Predicated region
        $region21: #{tpu_custom_call.1} parent=11 // pred_check
          %p248 = pneg %p107
        $region22: #{tpu_custom_call.1} parent=11 // pred_check_branch
          %250 = sbr.rel (%p248) target = $region24
        $region23: #{tpu_custom_call.1} parent=11 // pred_region
          _
        $region24: #{tpu_custom_call.1} parent=11 // pred_fallthru
          _
        // Predicated region
        $region25: #{tpu_custom_call.1} parent=11 // pred_check
          %p251 = pneg %p128
        $region26: #{tpu_custom_call.1} parent=11 // pred_check_branch
          %253 = sbr.rel (%p251) target = $region28
        $region27: #{tpu_custom_call.1} parent=11 // pred_region
          _
        $region28: #{tpu_custom_call.1} parent=11 // pred_fallthru
          _
        // Predicated region
        $region29: #{tpu_custom_call.1} parent=11 // pred_check
          %p254 = pneg %p149
        $region30: #{tpu_custom_call.1} parent=11 // pred_check_branch
          %256 = sbr.rel (%p254) target = $region32
        $region31: #{tpu_custom_call.1} parent=11 // pred_region
          _
        $region32: #{tpu_custom_call.1} parent=11 // pred_fallthru
          _
        // Predicated region
        $region33: #{tpu_custom_call.1} parent=11 // pred_check
          %p257 = pneg %p170
        $region34: #{tpu_custom_call.1} parent=11 // pred_check_branch
          %259 = sbr.rel (%p257) target = $region36
        $region35: #{tpu_custom_call.1} parent=11 // pred_region
          _
        $region36: #{tpu_custom_call.1} parent=11 // pred_fallthru
          _
        // Predicated region
        $region37: #{tpu_custom_call.1} parent=11 // pred_check
          %p260 = pneg %p191
        $region38: #{tpu_custom_call.1} parent=11 // pred_check_branch
          %262 = sbr.rel (%p260) target = $region40
        $region39: #{tpu_custom_call.1} parent=11 // pred_region
          _
        $region40: #{tpu_custom_call.1} parent=11 // pred_fallthru
          _
      $region12: #{tpu_custom_call.1} parent=5 // pred_fallthru
        _
      %p263 = scmp.lt.s32.totalorder %s18, 2
      // Predicated region
      $region41: #{tpu_custom_call.1} parent=5 // pred_check
        %p264 = pneg %p263
      $region42: #{tpu_custom_call.1} parent=5 // pred_check_branch
        %266 = sbr.rel (%p264) target = $region44
      $region43: #{tpu_custom_call.1} parent=5 // pred_region
        // Predicated region
        $region45: #{tpu_custom_call.1} parent=43 // pred_check
          %p267 = pneg %p38
        $region46: #{tpu_custom_call.1} parent=43 // pred_check_branch
          %269 = sbr.rel (%p267) target = $region48
        $region47: #{tpu_custom_call.1} parent=43 // pred_region
          %p270 = scmp.lt.s32.totalorder %s18, 1
          %s271 = scalar_select %p270, %s18, 1
          %s272 = smul.addr %s271, 4
          %s273 = scalar_lea.vmem %s0, %s272
        $region48: #{tpu_custom_call.1} parent=43 // pred_fallthru
          _
      $region44: #{tpu_custom_call.1} parent=5 // pred_fallthru
        _
      %p274 = scmp.le.s32.totalorder 1, %s18
      %p275 = scmp.lt.s32.totalorder %s18, 3
      %p276 = pnand %p274, %p275
      %p277 = pneg %p276
      // Predicated region
      $region49: #{tpu_custom_call.1} parent=5 // pred_check
        _
      $region50: #{tpu_custom_call.1} parent=5 // pred_check_branch
        %279 = sbr.rel (%p276) target = $region52
      $region51: #{tpu_custom_call.1} parent=5 // pred_region
        %s280 = ssub.s32 %s18, 1
        // Predicated region
        $region53: #{tpu_custom_call.1} parent=51 // pred_check
          %p281 = pneg %p86
        $region54: #{tpu_custom_call.1} parent=51 // pred_check_branch
          %283 = sbr.rel (%p281) target = $region56
        $region55: #{tpu_custom_call.1} parent=51 // pred_region
          %284 = dma.done [#allocation3], 6144
        $region56: #{tpu_custom_call.1} parent=51 // pred_fallthru
          _
        %p285 = scmp.lt.s32.totalorder %s23, 1
        %s286 = scalar_select %p285, %s23, 1
        %s287 = smul.addr %s286, 4
        %s288 = scalar_lea.vmem %s0, %s287
        %p289 = pneg %p44
        %p290 = pneg %p41
        %p291 = pneg %p65
        %p292 = pneg %p62
        %p293 = pneg %p86
        %p294 = pneg %p83
        %p295 = pneg %p107
        %p296 = pneg %p104
        %p297 = pneg %p128
        %p298 = pneg %p125
        %p299 = pneg %p149
        %p300 = pneg %p146
        %p301 = pneg %p170
        %p302 = pneg %p167
        %p303 = pneg %p191
        %p304 = pneg %p188
        %p305 = pneg %p217
        %p306 = pneg %p214
        %s307 = sand.u32 %s204, 1
        %s308 = scalar_lea.sflag [#allocation4], %s307
        %s309 = sand.u32 %s204, 1
        %s310 = smul.addr %s309, 4
        %s311 = scalar_lea.vmem [#allocation5], %s310
        %p312 = scmp.lt.s32.totalorder %s23, 1
        %s313 = scalar_select %p312, %s23, 1
        %s314 = smul.addr %s313, 4
        %s315 = scalar_lea.vmem %s0, %s314
        %v316 = vld [vmem:[%s315] sm:$0x7]
        %v317 = vlaneseq
        %v318 = vshrl.u32 %v317, 7
        %vm319 = vcmp.eq.s32.totalorder %v318, 0
        %v320 = vsel %vm319, %v316, 0.0
        %vm321 = vcmp.eq.s32.totalorder %v318, 1
        %v322 = vsel %vm321, %v316, 0.0
        %vm323 = vcmp.eq.s32.totalorder %v318, 2
        %v324 = vsel %vm323, %v316, 0.0
        %326 = vrot.lane.b32.xlu0 %v322, 64
        %v327 = vpop.permute.xlu0 %326
        %vm329 = vcmask 523264
        %v330 = vsel %vm329, %v320, %v327
        %v331 = vld [vmem:[%s1] sm:$0xff]
        %v332 = vld [vmem:[%s1 + $0x8] sm:$0xff]
        %v333 = vld [vmem:[%s1 + $0x10] sm:$0xff]
        %v334 = vld [vmem:[%s1 + $0x18] sm:$0xff]
        %v335 = vld [vmem:[%s1 + $0x20] sm:$0xff]
        %v336 = vld [vmem:[%s1 + $0x28] sm:$0xff]
        %v337 = vld [vmem:[%s1 + $0x30] sm:$0xff]
        %v338 = vld [vmem:[%s1 + $0x38] sm:$0xff]
        %v339 = vld [vmem:[%s1 + $0x40] sm:$0xff]
        %v340 = vld [vmem:[%s1 + $0x48] sm:$0xff]
        %v341 = vld [vmem:[%s1 + $0x50] sm:$0xff]
        %v342 = vld [vmem:[%s1 + $0x58] sm:$0xff]
        %v343 = vld [vmem:[%s1 + $0x60] sm:$0xff]
        %v344 = vld [vmem:[%s1 + $0x68] sm:$0xff]
        %v345 = vld [vmem:[%s1 + $0x70] sm:$0xff]
        %v346 = vld [vmem:[%s1 + $0x78] sm:$0xff]
        %v347 = vld [vmem:[%s1 + $0x80] sm:$0xff]
        %v348 = vld [vmem:[%s1 + $0x88] sm:$0xff]
        %v349 = vld [vmem:[%s1 + $0x90] sm:$0xff]
        %v350 = vld [vmem:[%s1 + $0x98] sm:$0xff]
        %v351 = vld [vmem:[%s1 + $0xa0] sm:$0xff]
        %v352 = vld [vmem:[%s1 + $0xa8] sm:$0xff]
        %v353 = vld [vmem:[%s1 + $0xb0] sm:$0xff]
        %v354 = vld [vmem:[%s1 + $0xb8] sm:$0xff]
        %v356 = vsel %vm329, %v324, 0
        %358 = vmatprep.subr.mxu0 0.0
        %359 = vmatpush1.msra.mxu0 %v331
        %360 = vmatprep.subr.mxu0 0.0
        %361 = vmatpush1.msra.mxu0 %v332
        %362 = vmatprep.subr.mxu0 0.0
        %363 = vmatpush1.msra.mxu0 %v333
        %364 = vmatprep.subr.mxu0 0.0
        %365 = vmatpush1.msra.mxu0 %v334
        %366 = vmatprep.subr.mxu0 0.0
        %367 = vmatpush1.msra.mxu0 %v335
        %368 = vmatprep.subr.mxu0 0.0
        %369 = vmatpush1.msra.mxu0 %v336
        %370 = vmatprep.subr.mxu0 0.0
        %371 = vmatpush1.msra.mxu0 %v337
        %372 = vmatprep.subr.mxu0 0.0
        %373 = vmatpush1.msra.mxu0 %v338
        %374 = vmatprep.subr.mxu0 0.0
        %375 = vmatpush1.msra.mxu0 %v339
        %376 = vmatprep.subr.mxu0 0.0
        %377 = vmatpush1.msra.mxu0 %v340
        %378 = vmatprep.subr.mxu0 0.0
        %379 = vmatpush1.msra.mxu0 %v341
        %380 = vmatprep.subr.mxu0 0.0
        %381 = vmatpush1.msra.mxu0 %v342
        %382 = vmatprep.subr.mxu0 0.0
        %383 = vmatpush1.msra.mxu0 %v343
        %384 = vmatprep.subr.mxu0 0.0
        %385 = vmatpush1.msra.mxu0 %v344
        %386 = vmatprep.subr.mxu0 0.0
        %387 = vmatpush1.msra.mxu0 %v345
        %388 = vmatprep.subr.mxu0 0.0
        %389 = vmatpush1.msra.mxu0 %v346
        %390 = vmatprep.subr.mxu0 0.0
        %391 = vmatpush1.msra.mxu0 %v347
        %392 = vmatprep.subr.mxu0 0.0
        %393 = vmatpush1.msra.mxu0 %v348
        %394 = vmatprep.subr.mxu0 0.0
        %395 = vmatpush1.msra.mxu0 %v349
        %396 = vmatprep.subr.mxu0 0.0
        %397 = vmatpush1.msra.mxu0 %v350
        %398 = vmatprep.subr.mxu0 0.0
        %399 = vmatpush1.msra.mxu0 %v351
        %400 = vmatprep.subr.mxu0 0.0
        %401 = vmatpush1.msra.mxu0 %v352
        %402 = vmatprep.subr.mxu0 0.0
        %403 = vmatpush1.msra.mxu0 %v353
        %404 = vmatprep.subr.mxu0 0.0
        %405 = vmatpush1.msra.mxu0 %v354
        %406 = vmatprep.subr.mxu0 0.0
        %407 = vmatpush1.msra.mxu0 0.0
        %408 = vmatprep.subr.mxu0 0.0
        %409 = vmatpush1.msra.mxu0 0.0
        %410 = vmatprep.subr.mxu0 0.0
        %411 = vmatpush1.msra.mxu0 0.0
        %412 = vmatprep.subr.mxu0 0.0
        %413 = vmatpush1.msra.mxu0 0.0
        %414 = vmatprep.subr.mxu0 0.0
        %415 = vmatpush1.msra.mxu0 0.0
        %416 = vmatprep.subr.mxu0 0.0
        %417 = vmatpush1.msra.mxu0 0.0
        %418 = vmatprep.subr.mxu0 0.0
        %419 = vmatpush1.msra.mxu0 0.0
        %420 = vmatprep.subr.mxu0 0.0
        %421 = vmatpush1.msra.mxu0 0.0
        %422 = vmatprep.mubr.f32.mxu0 %v356
        %423 = vmatmul.mubr.f32.gmra.mrb[0].mxu0 %v330
        %v424 = vpop.f32.mrb[0].mxu0
        %v425 = vadd.f32 0.0, %v424
        %v426 = vpop.f32.mrb[0].mxu0
        %427 = vdwg.mxu0
        %v428 = vld [vmem:[#allocation2] sm:$0xff]
        %v429 = vld [vmem:[#allocation2 + $0x8] sm:$0xff]
        %v430 = vld [vmem:[#allocation2 + $0x10] sm:$0xff]
        %v431 = vld [vmem:[#allocation2 + $0x18] sm:$0xff]
        %v432 = vld [vmem:[#allocation2 + $0x20] sm:$0xff]
        %v433 = vld [vmem:[#allocation2 + $0x28] sm:$0xff]
        %v434 = vld [vmem:[#allocation2 + $0x30] sm:$0xff]
        %v435 = vld [vmem:[#allocation2 + $0x38] sm:$0xff]
        %v436 = vld [vmem:[#allocation2 + $0x40] sm:$0xff]
        %v437 = vld [vmem:[#allocation2 + $0x48] sm:$0xff]
        %v438 = vld [vmem:[#allocation2 + $0x50] sm:$0xff]
        %v439 = vld [vmem:[#allocation2 + $0x58] sm:$0xff]
        %v440 = vld [vmem:[#allocation2 + $0x60] sm:$0xff]
        %v441 = vld [vmem:[#allocation2 + $0x68] sm:$0xff]
        %v442 = vld [vmem:[#allocation2 + $0x70] sm:$0xff]
        %v443 = vld [vmem:[#allocation2 + $0x78] sm:$0xff]
        %v444 = vld [vmem:[#allocation2 + $0x80] sm:$0xff]
        %v445 = vld [vmem:[#allocation2 + $0x88] sm:$0xff]
        %v446 = vld [vmem:[#allocation2 + $0x90] sm:$0xff]
        %v447 = vld [vmem:[#allocation2 + $0x98] sm:$0xff]
        %v448 = vld [vmem:[#allocation2 + $0xa0] sm:$0xff]
        %v449 = vld [vmem:[#allocation2 + $0xa8] sm:$0xff]
        %v450 = vld [vmem:[#allocation2 + $0xb0] sm:$0xff]
        %v451 = vld [vmem:[#allocation2 + $0xb8] sm:$0xff]
        %v452 = vld [vmem:[#allocation2 + $0xc0] sm:$0xff]
        %v453 = vld [vmem:[#allocation2 + $0xc8] sm:$0xff]
        %v454 = vld [vmem:[#allocation2 + $0xd0] sm:$0xff]
        %v455 = vld [vmem:[#allocation2 + $0xd8] sm:$0xff]
        %v456 = vld [vmem:[#allocation2 + $0xe0] sm:$0xff]
        %v457 = vld [vmem:[#allocation2 + $0xe8] sm:$0xff]
        %v458 = vld [vmem:[#allocation2 + $0xf0] sm:$0xff]
        %v459 = vld [vmem:[#allocation2 + $0xf8] sm:$0xff]
        %v460 = vld [vmem:[#allocation2 + $0x100] sm:$0xff]
        %v461 = vld [vmem:[#allocation2 + $0x108] sm:$0xff]
        %v462 = vld [vmem:[#allocation2 + $0x110] sm:$0xff]
        %v463 = vld [vmem:[#allocation2 + $0x118] sm:$0xff]
        %v464 = vld [vmem:[#allocation2 + $0x120] sm:$0xff]
        %v465 = vld [vmem:[#allocation2 + $0x128] sm:$0xff]
        %v466 = vld [vmem:[#allocation2 + $0x130] sm:$0xff]
        %v467 = vld [vmem:[#allocation2 + $0x138] sm:$0xff]
        %v468 = vld [vmem:[#allocation2 + $0x140] sm:$0xff]
        %v469 = vld [vmem:[#allocation2 + $0x148] sm:$0xff]
        %v470 = vld [vmem:[#allocation2 + $0x150] sm:$0xff]
        %v471 = vld [vmem:[#allocation2 + $0x158] sm:$0xff]
        %v472 = vld [vmem:[#allocation2 + $0x160] sm:$0xff]
        %v473 = vld [vmem:[#allocation2 + $0x168] sm:$0xff]
        %v474 = vld [vmem:[#allocation2 + $0x170] sm:$0xff]
        %v475 = vld [vmem:[#allocation2 + $0x178] sm:$0xff]
        %v476 = vld [vmem:[%s3] sm:$0xff]
        %vm477 = vcmask 23552
        %v479 = vsel %vm477, %v476, 0
        %vm481 = vcmask 1042432
        %v483 = vsel %vm481, %v425, 0
        %485 = vmatprep.subr.mxu0 0.0
        %486 = vmatpush1.msra.mxu0 %v483
        %487 = vmatprep.subr.mxu0 0.0
        %488 = vmatpush1.msra.mxu0 0.0
        %489 = vmatprep.subr.mxu0 0.0
        %490 = vmatpush1.msra.mxu0 0.0
        %491 = vmatprep.subr.mxu0 0.0
        %492 = vmatpush1.msra.mxu0 0.0
        %493 = vmatprep.subr.mxu0 0.0
        %494 = vmatpush1.msra.mxu0 0.0
        %495 = vmatprep.subr.mxu0 0.0
        %496 = vmatpush1.msra.mxu0 0.0
        %497 = vmatprep.subr.mxu0 0.0
        %498 = vmatpush1.msra.mxu0 0.0
        %499 = vmatprep.subr.mxu0 0.0
        %500 = vmatpush1.msra.mxu0 0.0
        %501 = vmatprep.subr.mxu0 0.0
        %502 = vmatpush1.msra.mxu0 0.0
        %503 = vmatprep.subr.mxu0 0.0
        %504 = vmatpush1.msra.mxu0 0.0
        %505 = vmatprep.subr.mxu0 0.0
        %506 = vmatpush1.msra.mxu0 0.0
        %507 = vmatprep.subr.mxu0 0.0
        %508 = vmatpush1.msra.mxu0 0.0
        %509 = vmatprep.subr.mxu0 0.0
        %510 = vmatpush1.msra.mxu0 0.0
        %511 = vmatprep.subr.mxu0 0.0
        %512 = vmatpush1.msra.mxu0 0.0
        %513 = vmatprep.subr.mxu0 0.0
        %514 = vmatpush1.msra.mxu0 0.0
        %515 = vmatprep.subr.mxu0 0.0
        %516 = vmatpush1.msra.mxu0 0.0
        %517 = vmatprep.subr.mxu0 0.0
        %518 = vmatpush1.msra.mxu0 0.0
        %519 = vmatprep.subr.mxu0 0.0
        %520 = vmatpush1.msra.mxu0 0.0
        %521 = vmatprep.subr.mxu0 0.0
        %522 = vmatpush1.msra.mxu0 0.0
        %523 = vmatprep.subr.mxu0 0.0
        %524 = vmatpush1.msra.mxu0 0.0
        %525 = vmatprep.subr.mxu0 0.0
        %526 = vmatpush1.msra.mxu0 0.0
        %527 = vmatprep.subr.mxu0 0.0
        %528 = vmatpush1.msra.mxu0 0.0
        %529 = vmatprep.subr.mxu0 0.0
        %530 = vmatpush1.msra.mxu0 0.0
        %531 = vmatprep.subr.mxu0 0.0
        %532 = vmatpush1.msra.mxu0 0.0
        %533 = vmatprep.subr.mxu0 0.0
        %534 = vmatpush1.msra.mxu0 0.0
        %535 = vmatprep.subr.mxu0 0.0
        %536 = vmatpush1.msra.mxu0 0.0
        %537 = vmatprep.subr.mxu0 0.0
        %538 = vmatpush1.msra.mxu0 0.0
        %539 = vmatprep.subr.mxu0 0.0
        %540 = vmatpush1.msra.mxu0 0.0
        %541 = vmatprep.subr.mxu0 0.0
        %542 = vmatpush1.msra.mxu0 0.0
        %543 = vmatprep.subr.mxu0 0.0
        %544 = vmatpush1.msra.mxu0 0.0
        %545 = vmatprep.subr.mxu0 0.0
        %546 = vmatpush1.msra.mxu0 0.0
        %547 = vmatprep.subr.mxu0 0.0
        %548 = vmatpush1.msra.mxu0 0.0
        %549 = vmatprep.mubr.f32.mxu0 0.0
        %550 = vmatmul.mubr.f32.gmra.mrb[0].mxu0 %v479
        %v551 = vpop.f32.mrb[0].mxu0
        %v552 = vadd.f32 0.0, %v551
        %v553 = vpop.f32.mrb[0].mxu0
        %554 = vdwg.mxu0
        %s555 = scalar_lea.vmem %s3, 8
        %v556 = vld [vmem:[%s555] sm:$0xff]
        %v558 = vsel %vm477, %v556, 0
        %560 = vmatprep.subr.mxu0 0.0
        %561 = vmatpush1.msra.mxu0 %v483
        %562 = vmatprep.subr.mxu0 0.0
        %563 = vmatpush1.msra.mxu0 0.0
        %564 = vmatprep.subr.mxu0 0.0
        %565 = vmatpush1.msra.mxu0 0.0
        %566 = vmatprep.subr.mxu0 0.0
        %567 = vmatpush1.msra.mxu0 0.0
        %568 = vmatprep.subr.mxu0 0.0
        %569 = vmatpush1.msra.mxu0 0.0
        %570 = vmatprep.subr.mxu0 0.0
        %571 = vmatpush1.msra.mxu0 0.0
        %572 = vmatprep.subr.mxu0 0.0
        %573 = vmatpush1.msra.mxu0 0.0
        %574 = vmatprep.subr.mxu0 0.0
        %575 = vmatpush1.msra.mxu0 0.0
        %576 = vmatprep.subr.mxu0 0.0
        %577 = vmatpush1.msra.mxu0 0.0
        %578 = vmatprep.subr.mxu0 0.0
        %579 = vmatpush1.msra.mxu0 0.0
        %580 = vmatprep.subr.mxu0 0.0
        %581 = vmatpush1.msra.mxu0 0.0
        %582 = vmatprep.subr.mxu0 0.0
        %583 = vmatpush1.msra.mxu0 0.0
        %584 = vmatprep.subr.mxu0 0.0
        %585 = vmatpush1.msra.mxu0 0.0
        %586 = vmatprep.subr.mxu0 0.0
        %587 = vmatpush1.msra.mxu0 0.0
        %588 = vmatprep.subr.mxu0 0.0
        %589 = vmatpush1.msra.mxu0 0.0
        %590 = vmatprep.subr.mxu0 0.0
        %591 = vmatpush1.msra.mxu0 0.0
        %592 = vmatprep.subr.mxu0 0.0
        %593 = vmatpush1.msra.mxu0 0.0
        %594 = vmatprep.subr.mxu0 0.0
        %595 = vmatpush1.msra.mxu0 0.0
        %596 = vmatprep.subr.mxu0 0.0
        %597 = vmatpush1.msra.mxu0 0.0
        %598 = vmatprep.subr.mxu0 0.0
        %599 = vmatpush1.msra.mxu0 0.0
        %600 = vmatprep.subr.mxu0 0.0
        %601 = vmatpush1.msra.mxu0 0.0
        %602 = vmatprep.subr.mxu0 0.0
        %603 = vmatpush1.msra.mxu0 0.0
        %604 = vmatprep.subr.mxu0 0.0
        %605 = vmatpush1.msra.mxu0 0.0
        %606 = vmatprep.subr.mxu0 0.0
        %607 = vmatpush1.msra.mxu0 0.0
        %608 = vmatprep.subr.mxu0 0.0
        %609 = vmatpush1.msra.mxu0 0.0
        %610 = vmatprep.subr.mxu0 0.0
        %611 = vmatpush1.msra.mxu0 0.0
        %612 = vmatprep.subr.mxu0 0.0
        %613 = vmatpush1.msra.mxu0 0.0
        %614 = vmatprep.subr.mxu0 0.0
        %615 = vmatpush1.msra.mxu0 0.0
        %616 = vmatprep.subr.mxu0 0.0
        %617 = vmatpush1.msra.mxu0 0.0
        %618 = vmatprep.subr.mxu0 0.0
        %619 = vmatpush1.msra.mxu0 0.0
        %620 = vmatprep.subr.mxu0 0.0
        %621 = vmatpush1.msra.mxu0 0.0
        %622 = vmatprep.subr.mxu0 0.0
        %623 = vmatpush1.msra.mxu0 0.0
        %624 = vmatprep.mubr.f32.mxu0 0.0
        %625 = vmatmul.mubr.f32.gmra.mrb[0].mxu0 %v558
        %v626 = vpop.f32.mrb[0].mxu0
        %v627 = vadd.f32 0.0, %v626
        %v628 = vpop.f32.mrb[0].mxu0
        %629 = vdwg.mxu0
        %s630 = scalar_lea.vmem %s3, 16
        %v631 = vld [vmem:[%s630] sm:$0xff]
        %v633 = vsel %vm477, %v631, 0
        %635 = vmatprep.subr.mxu0 0.0
        %636 = vmatpush1.msra.mxu0 %v483
        %637 = vmatprep.subr.mxu0 0.0
        %638 = vmatpush1.msra.mxu0 0.0
        %639 = vmatprep.subr.mxu0 0.0
        %640 = vmatpush1.msra.mxu0 0.0
        %641 = vmatprep.subr.mxu0 0.0
        %642 = vmatpush1.msra.mxu0 0.0
        %643 = vmatprep.subr.mxu0 0.0
        %644 = vmatpush1.msra.mxu0 0.0
        %645 = vmatprep.subr.mxu0 0.0
        %646 = vmatpush1.msra.mxu0 0.0
        %647 = vmatprep.subr.mxu0 0.0
        %648 = vmatpush1.msra.mxu0 0.0
        %649 = vmatprep.subr.mxu0 0.0
        %650 = vmatpush1.msra.mxu0 0.0
        %651 = vmatprep.subr.mxu0 0.0
        %652 = vmatpush1.msra.mxu0 0.0
        %653 = vmatprep.subr.mxu0 0.0
        %654 = vmatpush1.msra.mxu0 0.0
        %655 = vmatprep.subr.mxu0 0.0
        %656 = vmatpush1.msra.mxu0 0.0
        %657 = vmatprep.subr.mxu0 0.0
        %658 = vmatpush1.msra.mxu0 0.0
        %659 = vmatprep.subr.mxu0 0.0
        %660 = vmatpush1.msra.mxu0 0.0
        %661 = vmatprep.subr.mxu0 0.0
        %662 = vmatpush1.msra.mxu0 0.0
        %663 = vmatprep.subr.mxu0 0.0
        %664 = vmatpush1.msra.mxu0 0.0
        %665 = vmatprep.subr.mxu0 0.0
        %666 = vmatpush1.msra.mxu0 0.0
        %667 = vmatprep.subr.mxu0 0.0
        %668 = vmatpush1.msra.mxu0 0.0
        %669 = vmatprep.subr.mxu0 0.0
        %670 = vmatpush1.msra.mxu0 0.0
        %671 = vmatprep.subr.mxu0 0.0
        %672 = vmatpush1.msra.mxu0 0.0
        %673 = vmatprep.subr.mxu0 0.0
        %674 = vmatpush1.msra.mxu0 0.0
        %675 = vmatprep.subr.mxu0 0.0
        %676 = vmatpush1.msra.mxu0 0.0
        %677 = vmatprep.subr.mxu0 0.0
        %678 = vmatpush1.msra.mxu0 0.0
        %679 = vmatprep.subr.mxu0 0.0
        %680 = vmatpush1.msra.mxu0 0.0
        %681 = vmatprep.subr.mxu0 0.0
        %682 = vmatpush1.msra.mxu0 0.0
        %683 = vmatprep.subr.mxu0 0.0
        %684 = vmatpush1.msra.mxu0 0.0
        %685 = vmatprep.subr.mxu0 0.0
        %686 = vmatpush1.msra.mxu0 0.0
        %687 = vmatprep.subr.mxu0 0.0
        %688 = vmatpush1.msra.mxu0 0.0
        %689 = vmatprep.subr.mxu0 0.0
        %690 = vmatpush1.msra.mxu0 0.0
        %691 = vmatprep.subr.mxu0 0.0
        %692 = vmatpush1.msra.mxu0 0.0
        %693 = vmatprep.subr.mxu0 0.0
        %694 = vmatpush1.msra.mxu0 0.0
        %695 = vmatprep.subr.mxu0 0.0
        %696 = vmatpush1.msra.mxu0 0.0
        %697 = vmatprep.subr.mxu0 0.0
        %698 = vmatpush1.msra.mxu0 0.0
        %699 = vmatprep.mubr.f32.mxu0 0.0
        %700 = vmatmul.mubr.f32.gmra.mrb[0].mxu0 %v633
        %v701 = vpop.f32.mrb[0].mxu0
        %v702 = vadd.f32 0.0, %v701
        %v703 = vpop.f32.mrb[0].mxu0
        %704 = vdwg.mxu0
        %v705 = vld [vmem:[%s4] sm:$0xff]
        %707 = vset.pattern.permute.xlu0 0
        %708 = vperm.xlu0 %707, %v705
        %v709 = vpop.permute.xlu0 %708
        %711 = vmatprep.subr.mxu0 0.0
        %712 = vmatpush1.msra.mxu0 %v428
        %713 = vmatprep.subr.mxu0 0.0
        %714 = vmatpush1.msra.mxu0 %v429
        %715 = vmatprep.subr.mxu0 0.0
        %716 = vmatpush1.msra.mxu0 %v430
        %717 = vmatprep.subr.mxu0 0.0
        %718 = vmatpush1.msra.mxu0 %v431
        %719 = vmatprep.subr.mxu0 0.0
        %720 = vmatpush1.msra.mxu0 %v432
        %721 = vmatprep.subr.mxu0 0.0
        %722 = vmatpush1.msra.mxu0 %v433
        %723 = vmatprep.subr.mxu0 0.0
        %724 = vmatpush1.msra.mxu0 %v434
        %725 = vmatprep.subr.mxu0 0.0
        %726 = vmatpush1.msra.mxu0 %v435
        %727 = vmatprep.subr.mxu0 0.0
        %728 = vmatpush1.msra.mxu0 %v436
        %729 = vmatprep.subr.mxu0 0.0
        %730 = vmatpush1.msra.mxu0 %v437
        %731 = vmatprep.subr.mxu0 0.0
        %732 = vmatpush1.msra.mxu0 %v438
        %733 = vmatprep.subr.mxu0 0.0
        %734 = vmatpush1.msra.mxu0 %v439
        %735 = vmatprep.subr.mxu0 0.0
        %736 = vmatpush1.msra.mxu0 %v440
        %737 = vmatprep.subr.mxu0 0.0
        %738 = vmatpush1.msra.mxu0 %v441
        %739 = vmatprep.subr.mxu0 0.0
        %740 = vmatpush1.msra.mxu0 %v442
        %741 = vmatprep.subr.mxu0 0.0
        %742 = vmatpush1.msra.mxu0 %v443
        %743 = vmatprep.subr.mxu0 0.0
        %744 = vmatpush1.msra.mxu0 %v444
        %745 = vmatprep.subr.mxu0 0.0
        %746 = vmatpush1.msra.mxu0 %v445
        %747 = vmatprep.subr.mxu0 0.0
        %748 = vmatpush1.msra.mxu0 %v446
        %749 = vmatprep.subr.mxu0 0.0
        %750 = vmatpush1.msra.mxu0 %v447
        %751 = vmatprep.subr.mxu0 0.0
        %752 = vmatpush1.msra.mxu0 %v448
        %753 = vmatprep.subr.mxu0 0.0
        %754 = vmatpush1.msra.mxu0 %v449
        %755 = vmatprep.subr.mxu0 0.0
        %756 = vmatpush1.msra.mxu0 %v450
        %757 = vmatprep.subr.mxu0 0.0
        %758 = vmatpush1.msra.mxu0 %v451
        %759 = vmatprep.subr.mxu0 0.0
        %760 = vmatpush1.msra.mxu0 %v452
        %761 = vmatprep.subr.mxu0 0.0
        %762 = vmatpush1.msra.mxu0 %v453
        %763 = vmatprep.subr.mxu0 0.0
        %764 = vmatpush1.msra.mxu0 %v454
        %765 = vmatprep.subr.mxu0 0.0
        %766 = vmatpush1.msra.mxu0 %v455
        %767 = vmatprep.subr.mxu0 0.0
        %768 = vmatpush1.msra.mxu0 %v456
        %769 = vmatprep.subr.mxu0 0.0
        %770 = vmatpush1.msra.mxu0 %v457
        %771 = vmatprep.subr.mxu0 0.0
        %772 = vmatpush1.msra.mxu0 %v458
        %773 = vmatprep.subr.mxu0 0.0
        %774 = vmatpush1.msra.mxu0 %v459
        %775 = vmatprep.mubr.f32.mxu0 %v627
        %776 = vmatmul.mubr.f32.gmra.mrb[0].mxu0 %v552
        %v777 = vpop.f32.mrb[0].mxu0
        %v778 = vadd.f32 %v709, %v777
        %v779 = vpop.f32.mrb[0].mxu0
        %780 = vdwg.mxu0
        %781 = vmatprep.subr.mxu0 0.0
        %782 = vmatpush1.msra.mxu0 %v460
        %783 = vmatprep.subr.mxu0 0.0
        %784 = vmatpush1.msra.mxu0 %v461
        %785 = vmatprep.subr.mxu0 0.0
        %786 = vmatpush1.msra.mxu0 %v462
        %787 = vmatprep.subr.mxu0 0.0
        %788 = vmatpush1.msra.mxu0 %v463
        %789 = vmatprep.subr.mxu0 0.0
        %790 = vmatpush1.msra.mxu0 %v464
        %791 = vmatprep.subr.mxu0 0.0
        %792 = vmatpush1.msra.mxu0 %v465
        %793 = vmatprep.subr.mxu0 0.0
        %794 = vmatpush1.msra.mxu0 %v466
        %795 = vmatprep.subr.mxu0 0.0
        %796 = vmatpush1.msra.mxu0 %v467
        %797 = vmatprep.subr.mxu0 0.0
        %798 = vmatpush1.msra.mxu0 %v468
        %799 = vmatprep.subr.mxu0 0.0
        %800 = vmatpush1.msra.mxu0 %v469
        %801 = vmatprep.subr.mxu0 0.0
        %802 = vmatpush1.msra.mxu0 %v470
        %803 = vmatprep.subr.mxu0 0.0
        %804 = vmatpush1.msra.mxu0 %v471
        %805 = vmatprep.subr.mxu0 0.0
        %806 = vmatpush1.msra.mxu0 %v472
        %807 = vmatprep.subr.mxu0 0.0
        %808 = vmatpush1.msra.mxu0 %v473
        %809 = vmatprep.subr.mxu0 0.0
        %810 = vmatpush1.msra.mxu0 %v474
        %811 = vmatprep.subr.mxu0 0.0
        %812 = vmatpush1.msra.mxu0 %v475
        %813 = vmatprep.subr.mxu0 0.0
        %814 = vmatpush1.msra.mxu0 0.0
        %815 = vmatprep.subr.mxu0 0.0
        %816 = vmatpush1.msra.mxu0 0.0
        %817 = vmatprep.subr.mxu0 0.0
        %818 = vmatpush1.msra.mxu0 0.0
        %819 = vmatprep.subr.mxu0 0.0
        %820 = vmatpush1.msra.mxu0 0.0
        %821 = vmatprep.subr.mxu0 0.0
        %822 = vmatpush1.msra.mxu0 0.0
        %823 = vmatprep.subr.mxu0 0.0
        %824 = vmatpush1.msra.mxu0 0.0
        %825 = vmatprep.subr.mxu0 0.0
        %826 = vmatpush1.msra.mxu0 0.0
        %827 = vmatprep.subr.mxu0 0.0
        %828 = vmatpush1.msra.mxu0 0.0
        %829 = vmatprep.subr.mxu0 0.0
        %830 = vmatpush1.msra.mxu0 0.0
        %831 = vmatprep.subr.mxu0 0.0
        %832 = vmatpush1.msra.mxu0 0.0
        %833 = vmatprep.subr.mxu0 0.0
        %834 = vmatpush1.msra.mxu0 0.0
        %835 = vmatprep.subr.mxu0 0.0
        %836 = vmatpush1.msra.mxu0 0.0
        %837 = vmatprep.subr.mxu0 0.0
        %838 = vmatpush1.msra.mxu0 0.0
        %839 = vmatprep.subr.mxu0 0.0
        %840 = vmatpush1.msra.mxu0 0.0
        %841 = vmatprep.subr.mxu0 0.0
        %842 = vmatpush1.msra.mxu0 0.0
        %843 = vmatprep.subr.mxu0 0.0
        %844 = vmatpush1.msra.mxu0 0.0
        %845 = vmatprep.mubr.f32.mxu0 0.0
        %846 = vmatmul.mubr.f32.gmra.mrb[0].mxu0 %v702
        %v847 = vpop.f32.mrb[0].mxu0
        %v848 = vadd.f32 %v778, %v847
        %v849 = vpop.f32.mrb[0].mxu0
        %850 = vdwg.mxu0
        %v851 = vmax.f32 %v848, 0.0
        %v852 = vld [vmem:[%s5] sm:$0xf]
        %vm853 = vcmask 64512
        %v855 = vsel %vm853, %v852, 0
        %857 = vmatprep.subr.mxu0 0.0
        %858 = vmatpush1.msra.mxu0 %v851
        %859 = vmatprep.subr.mxu0 0.0
        %860 = vmatpush1.msra.mxu0 0.0
        %861 = vmatprep.subr.mxu0 0.0
        %862 = vmatpush1.msra.mxu0 0.0
        %863 = vmatprep.subr.mxu0 0.0
        %864 = vmatpush1.msra.mxu0 0.0
        %865 = vmatprep.subr.mxu0 0.0
        %866 = vmatpush1.msra.mxu0 0.0
        %867 = vmatprep.subr.mxu0 0.0
        %868 = vmatpush1.msra.mxu0 0.0
        %869 = vmatprep.subr.mxu0 0.0
        %870 = vmatpush1.msra.mxu0 0.0
        %871 = vmatprep.subr.mxu0 0.0
        %872 = vmatpush1.msra.mxu0 0.0
        %873 = vmatprep.subr.mxu0 0.0
        %874 = vmatpush1.msra.mxu0 0.0
        %875 = vmatprep.subr.mxu0 0.0
        %876 = vmatpush1.msra.mxu0 0.0
        %877 = vmatprep.subr.mxu0 0.0
        %878 = vmatpush1.msra.mxu0 0.0
        %879 = vmatprep.subr.mxu0 0.0
        %880 = vmatpush1.msra.mxu0 0.0
        %881 = vmatprep.subr.mxu0 0.0
        %882 = vmatpush1.msra.mxu0 0.0
        %883 = vmatprep.subr.mxu0 0.0
        %884 = vmatpush1.msra.mxu0 0.0
        %885 = vmatprep.subr.mxu0 0.0
        %886 = vmatpush1.msra.mxu0 0.0
        %887 = vmatprep.subr.mxu0 0.0
        %888 = vmatpush1.msra.mxu0 0.0
        %889 = vmatprep.subr.mxu0 0.0
        %890 = vmatpush1.msra.mxu0 0.0
        %891 = vmatprep.subr.mxu0 0.0
        %892 = vmatpush1.msra.mxu0 0.0
        %893 = vmatprep.subr.mxu0 0.0
        %894 = vmatpush1.msra.mxu0 0.0
        %895 = vmatprep.subr.mxu0 0.0
        %896 = vmatpush1.msra.mxu0 0.0
        %897 = vmatprep.subr.mxu0 0.0
        %898 = vmatpush1.msra.mxu0 0.0
        %899 = vmatprep.subr.mxu0 0.0
        %900 = vmatpush1.msra.mxu0 0.0
        %901 = vmatprep.subr.mxu0 0.0
        %902 = vmatpush1.msra.mxu0 0.0
        %903 = vmatprep.subr.mxu0 0.0
        %904 = vmatpush1.msra.mxu0 0.0
        %905 = vmatprep.subr.mxu0 0.0
        %906 = vmatpush1.msra.mxu0 0.0
        %907 = vmatprep.subr.mxu0 0.0
        %908 = vmatpush1.msra.mxu0 0.0
        %909 = vmatprep.subr.mxu0 0.0
        %910 = vmatpush1.msra.mxu0 0.0
        %911 = vmatprep.subr.mxu0 0.0
        %912 = vmatpush1.msra.mxu0 0.0
        %913 = vmatprep.subr.mxu0 0.0
        %914 = vmatpush1.msra.mxu0 0.0
        %915 = vmatprep.subr.mxu0 0.0
        %916 = vmatpush1.msra.mxu0 0.0
        %917 = vmatprep.subr.mxu0 0.0
        %918 = vmatpush1.msra.mxu0 0.0
        %919 = vmatprep.subr.mxu0 0.0
        %920 = vmatpush1.msra.mxu0 0.0
        %921 = vmatprep.mubr.f32.mxu0 0.0
        %922 = vmatmul.mubr.f32.gmra.mrb[0].mxu0 %v855
        %v923 = vpop.f32.mrb[0].mxu0
        %v924 = vadd.f32 0.0, %v923
        %v925 = vpop.f32.mrb[0].mxu0
        %926 = vdwg.mxu0
        %s927 = scalar_lea.vmem %s5, 4
        %v928 = vld [vmem:[%s927] sm:$0xf]
        %v930 = vsel %vm853, %v928, 0
        %932 = vmatprep.subr.mxu0 0.0
        %933 = vmatpush1.msra.mxu0 %v851
        %934 = vmatprep.subr.mxu0 0.0
        %935 = vmatpush1.msra.mxu0 0.0
        %936 = vmatprep.subr.mxu0 0.0
        %937 = vmatpush1.msra.mxu0 0.0
        %938 = vmatprep.subr.mxu0 0.0
        %939 = vmatpush1.msra.mxu0 0.0
        %940 = vmatprep.subr.mxu0 0.0
        %941 = vmatpush1.msra.mxu0 0.0
        %942 = vmatprep.subr.mxu0 0.0
        %943 = vmatpush1.msra.mxu0 0.0
        %944 = vmatprep.subr.mxu0 0.0
        %945 = vmatpush1.msra.mxu0 0.0
        %946 = vmatprep.subr.mxu0 0.0
        %947 = vmatpush1.msra.mxu0 0.0
        %948 = vmatprep.subr.mxu0 0.0
        %949 = vmatpush1.msra.mxu0 0.0
        %950 = vmatprep.subr.mxu0 0.0
        %951 = vmatpush1.msra.mxu0 0.0
        %952 = vmatprep.subr.mxu0 0.0
        %953 = vmatpush1.msra.mxu0 0.0
        %954 = vmatprep.subr.mxu0 0.0
        %955 = vmatpush1.msra.mxu0 0.0
        %956 = vmatprep.subr.mxu0 0.0
        %957 = vmatpush1.msra.mxu0 0.0
        %958 = vmatprep.subr.mxu0 0.0
        %959 = vmatpush1.msra.mxu0 0.0
        %960 = vmatprep.subr.mxu0 0.0
        %961 = vmatpush1.msra.mxu0 0.0
        %962 = vmatprep.subr.mxu0 0.0
        %963 = vmatpush1.msra.mxu0 0.0
        %964 = vmatprep.subr.mxu0 0.0
        %965 = vmatpush1.msra.mxu0 0.0
        %966 = vmatprep.subr.mxu0 0.0
        %967 = vmatpush1.msra.mxu0 0.0
        %968 = vmatprep.subr.mxu0 0.0
        %969 = vmatpush1.msra.mxu0 0.0
        %970 = vmatprep.subr.mxu0 0.0
        %971 = vmatpush1.msra.mxu0 0.0
        %972 = vmatprep.subr.mxu0 0.0
        %973 = vmatpush1.msra.mxu0 0.0
        %974 = vmatprep.subr.mxu0 0.0
        %975 = vmatpush1.msra.mxu0 0.0
        %976 = vmatprep.subr.mxu0 0.0
        %977 = vmatpush1.msra.mxu0 0.0
        %978 = vmatprep.subr.mxu0 0.0
        %979 = vmatpush1.msra.mxu0 0.0
        %980 = vmatprep.subr.mxu0 0.0
        %981 = vmatpush1.msra.mxu0 0.0
        %982 = vmatprep.subr.mxu0 0.0
        %983 = vmatpush1.msra.mxu0 0.0
        %984 = vmatprep.subr.mxu0 0.0
        %985 = vmatpush1.msra.mxu0 0.0
        %986 = vmatprep.subr.mxu0 0.0
        %987 = vmatpush1.msra.mxu0 0.0
        %988 = vmatprep.subr.mxu0 0.0
        %989 = vmatpush1.msra.mxu0 0.0
        %990 = vmatprep.subr.mxu0 0.0
        %991 = vmatpush1.msra.mxu0 0.0
        %992 = vmatprep.subr.mxu0 0.0
        %993 = vmatpush1.msra.mxu0 0.0
        %994 = vmatprep.subr.mxu0 0.0
        %995 = vmatpush1.msra.mxu0 0.0
        %996 = vmatprep.mubr.f32.mxu0 0.0
        %997 = vmatmul.mubr.f32.gmra.mrb[0].mxu0 %v930
        %v998 = vpop.f32.mrb[0].mxu0
        %v999 = vadd.f32 0.0, %v998
        %v1000 = vpop.f32.mrb[0].mxu0
        %1001 = vdwg.mxu0
        %s1002 = scalar_lea.vmem %s5, 8
        %v1003 = vld [vmem:[%s1002] sm:$0xf]
        %v1005 = vsel %vm853, %v1003, 0
        %1007 = vmatprep.subr.mxu0 0.0
        %1008 = vmatpush1.msra.mxu0 %v851
        %1009 = vmatprep.subr.mxu0 0.0
        %1010 = vmatpush1.msra.mxu0 0.0
        %1011 = vmatprep.subr.mxu0 0.0
        %1012 = vmatpush1.msra.mxu0 0.0
        %1013 = vmatprep.subr.mxu0 0.0
        %1014 = vmatpush1.msra.mxu0 0.0
        %1015 = vmatprep.subr.mxu0 0.0
        %1016 = vmatpush1.msra.mxu0 0.0
        %1017 = vmatprep.subr.mxu0 0.0
        %1018 = vmatpush1.msra.mxu0 0.0
        %1019 = vmatprep.subr.mxu0 0.0
        %1020 = vmatpush1.msra.mxu0 0.0
        %1021 = vmatprep.subr.mxu0 0.0
        %1022 = vmatpush1.msra.mxu0 0.0
        %1023 = vmatprep.subr.mxu0 0.0
        %1024 = vmatpush1.msra.mxu0 0.0
        %1025 = vmatprep.subr.mxu0 0.0
        %1026 = vmatpush1.msra.mxu0 0.0
        %1027 = vmatprep.subr.mxu0 0.0
        %1028 = vmatpush1.msra.mxu0 0.0
        %1029 = vmatprep.subr.mxu0 0.0
        %1030 = vmatpush1.msra.mxu0 0.0
        %1031 = vmatprep.subr.mxu0 0.0
        %1032 = vmatpush1.msra.mxu0 0.0
        %1033 = vmatprep.subr.mxu0 0.0
        %1034 = vmatpush1.msra.mxu0 0.0
        %1035 = vmatprep.subr.mxu0 0.0
        %1036 = vmatpush1.msra.mxu0 0.0
        %1037 = vmatprep.subr.mxu0 0.0
        %1038 = vmatpush1.msra.mxu0 0.0
        %1039 = vmatprep.subr.mxu0 0.0
        %1040 = vmatpush1.msra.mxu0 0.0
        %1041 = vmatprep.subr.mxu0 0.0
        %1042 = vmatpush1.msra.mxu0 0.0
        %1043 = vmatprep.subr.mxu0 0.0
        %1044 = vmatpush1.msra.mxu0 0.0
        %1045 = vmatprep.subr.mxu0 0.0
        %1046 = vmatpush1.msra.mxu0 0.0
        %1047 = vmatprep.subr.mxu0 0.0
        %1048 = vmatpush1.msra.mxu0 0.0
        %1049 = vmatprep.subr.mxu0 0.0
        %1050 = vmatpush1.msra.mxu0 0.0
        %1051 = vmatprep.subr.mxu0 0.0
        %1052 = vmatpush1.msra.mxu0 0.0
        %1053 = vmatprep.subr.mxu0 0.0
        %1054 = vmatpush1.msra.mxu0 0.0
        %1055 = vmatprep.subr.mxu0 0.0
        %1056 = vmatpush1.msra.mxu0 0.0
        %1057 = vmatprep.subr.mxu0 0.0
        %1058 = vmatpush1.msra.mxu0 0.0
        %1059 = vmatprep.subr.mxu0 0.0
        %1060 = vmatpush1.msra.mxu0 0.0
        %1061 = vmatprep.subr.mxu0 0.0
        %1062 = vmatpush1.msra.mxu0 0.0
        %1063 = vmatprep.subr.mxu0 0.0
        %1064 = vmatpush1.msra.mxu0 0.0
        %1065 = vmatprep.subr.mxu0 0.0
        %1066 = vmatpush1.msra.mxu0 0.0
        %1067 = vmatprep.subr.mxu0 0.0
        %1068 = vmatpush1.msra.mxu0 0.0
        %1069 = vmatprep.subr.mxu0 0.0
        %1070 = vmatpush1.msra.mxu0 0.0
        %1071 = vmatprep.mubr.f32.mxu0 0.0
        %1072 = vmatmul.mubr.f32.gmra.mrb[0].mxu0 %v1005
        %v1073 = vpop.f32.mrb[0].mxu0
        %v1074 = vadd.f32 0.0, %v1073
        %v1075 = vpop.f32.mrb[0].mxu0
        %1076 = vdwg.mxu0
        %v1077 = vld [vmem:[%s6] sm:$0xf]
        %1079 = vset.pattern.permute.xlu0 0
        %1080 = vperm.xlu0 %1079, %v1077
        %v1081 = vpop.permute.xlu0 %1080
        %1083 = vmatprep.subr.mxu0 0.0
        %1084 = vmatpush1.msra.mxu0 %v428
        %1085 = vmatprep.subr.mxu0 0.0
        %1086 = vmatpush1.msra.mxu0 %v429
        %1087 = vmatprep.subr.mxu0 0.0
        %1088 = vmatpush1.msra.mxu0 %v430
        %1089 = vmatprep.subr.mxu0 0.0
        %1090 = vmatpush1.msra.mxu0 %v431
        %1091 = vmatprep.subr.mxu0 0.0
        %1092 = vmatpush1.msra.mxu0 %v432
        %1093 = vmatprep.subr.mxu0 0.0
        %1094 = vmatpush1.msra.mxu0 %v433
        %1095 = vmatprep.subr.mxu0 0.0
        %1096 = vmatpush1.msra.mxu0 %v434
        %1097 = vmatprep.subr.mxu0 0.0
        %1098 = vmatpush1.msra.mxu0 %v435
        %1099 = vmatprep.subr.mxu0 0.0
        %1100 = vmatpush1.msra.mxu0 %v436
        %1101 = vmatprep.subr.mxu0 0.0
        %1102 = vmatpush1.msra.mxu0 %v437
        %1103 = vmatprep.subr.mxu0 0.0
        %1104 = vmatpush1.msra.mxu0 %v438
        %1105 = vmatprep.subr.mxu0 0.0
        %1106 = vmatpush1.msra.mxu0 %v439
        %1107 = vmatprep.subr.mxu0 0.0
        %1108 = vmatpush1.msra.mxu0 %v440
        %1109 = vmatprep.subr.mxu0 0.0
        %1110 = vmatpush1.msra.mxu0 %v441
        %1111 = vmatprep.subr.mxu0 0.0
        %1112 = vmatpush1.msra.mxu0 %v442
        %1113 = vmatprep.subr.mxu0 0.0
        %1114 = vmatpush1.msra.mxu0 %v443
        %1115 = vmatprep.subr.mxu0 0.0
        %1116 = vmatpush1.msra.mxu0 %v444
        %1117 = vmatprep.subr.mxu0 0.0
        %1118 = vmatpush1.msra.mxu0 %v445
        %1119 = vmatprep.subr.mxu0 0.0
        %1120 = vmatpush1.msra.mxu0 %v446
        %1121 = vmatprep.subr.mxu0 0.0
        %1122 = vmatpush1.msra.mxu0 %v447
        %1123 = vmatprep.subr.mxu0 0.0
        %1124 = vmatpush1.msra.mxu0 %v448
        %1125 = vmatprep.subr.mxu0 0.0
        %1126 = vmatpush1.msra.mxu0 %v449
        %1127 = vmatprep.subr.mxu0 0.0
        %1128 = vmatpush1.msra.mxu0 %v450
        %1129 = vmatprep.subr.mxu0 0.0
        %1130 = vmatpush1.msra.mxu0 %v451
        %1131 = vmatprep.subr.mxu0 0.0
        %1132 = vmatpush1.msra.mxu0 %v452
        %1133 = vmatprep.subr.mxu0 0.0
        %1134 = vmatpush1.msra.mxu0 %v453
        %1135 = vmatprep.subr.mxu0 0.0
        %1136 = vmatpush1.msra.mxu0 %v454
        %1137 = vmatprep.subr.mxu0 0.0
        %1138 = vmatpush1.msra.mxu0 %v455
        %1139 = vmatprep.subr.mxu0 0.0
        %1140 = vmatpush1.msra.mxu0 %v456
        %1141 = vmatprep.subr.mxu0 0.0
        %1142 = vmatpush1.msra.mxu0 %v457
        %1143 = vmatprep.subr.mxu0 0.0
        %1144 = vmatpush1.msra.mxu0 %v458
        %1145 = vmatprep.subr.mxu0 0.0
        %1146 = vmatpush1.msra.mxu0 %v459
        %1147 = vmatprep.mubr.f32.mxu0 %v999
        %1148 = vmatmul.mubr.f32.gmra.mrb[0].mxu0 %v924
        %v1149 = vpop.f32.mrb[0].mxu0
        %v1150 = vadd.f32 %v1081, %v1149
        %v1151 = vpop.f32.mrb[0].mxu0
        %1152 = vdwg.mxu0
        %1153 = vmatprep.subr.mxu0 0.0
        %1154 = vmatpush1.msra.mxu0 %v460
        %1155 = vmatprep.subr.mxu0 0.0
        %1156 = vmatpush1.msra.mxu0 %v461
        %1157 = vmatprep.subr.mxu0 0.0
        %1158 = vmatpush1.msra.mxu0 %v462
        %1159 = vmatprep.subr.mxu0 0.0
        %1160 = vmatpush1.msra.mxu0 %v463
        %1161 = vmatprep.subr.mxu0 0.0
        %1162 = vmatpush1.msra.mxu0 %v464
        %1163 = vmatprep.subr.mxu0 0.0
        %1164 = vmatpush1.msra.mxu0 %v465
        %1165 = vmatprep.subr.mxu0 0.0
        %1166 = vmatpush1.msra.mxu0 %v466
        %1167 = vmatprep.subr.mxu0 0.0
        %1168 = vmatpush1.msra.mxu0 %v467
        %1169 = vmatprep.subr.mxu0 0.0
        %1170 = vmatpush1.msra.mxu0 %v468
        %1171 = vmatprep.subr.mxu0 0.0
        %1172 = vmatpush1.msra.mxu0 %v469
        %1173 = vmatprep.subr.mxu0 0.0
        %1174 = vmatpush1.msra.mxu0 %v470
        %1175 = vmatprep.subr.mxu0 0.0
        %1176 = vmatpush1.msra.mxu0 %v471
        %1177 = vmatprep.subr.mxu0 0.0
        %1178 = vmatpush1.msra.mxu0 %v472
        %1179 = vmatprep.subr.mxu0 0.0
        %1180 = vmatpush1.msra.mxu0 %v473
        %1181 = vmatprep.subr.mxu0 0.0
        %1182 = vmatpush1.msra.mxu0 %v474
        %1183 = vmatprep.subr.mxu0 0.0
        %1184 = vmatpush1.msra.mxu0 %v475
        %1185 = vmatprep.subr.mxu0 0.0
        %1186 = vmatpush1.msra.mxu0 0.0
        %1187 = vmatprep.subr.mxu0 0.0
        %1188 = vmatpush1.msra.mxu0 0.0
        %1189 = vmatprep.subr.mxu0 0.0
        %1190 = vmatpush1.msra.mxu0 0.0
        %1191 = vmatprep.subr.mxu0 0.0
        %1192 = vmatpush1.msra.mxu0 0.0
        %1193 = vmatprep.subr.mxu0 0.0
        %1194 = vmatpush1.msra.mxu0 0.0
        %1195 = vmatprep.subr.mxu0 0.0
        %1196 = vmatpush1.msra.mxu0 0.0
        %1197 = vmatprep.subr.mxu0 0.0
        %1198 = vmatpush1.msra.mxu0 0.0
        %1199 = vmatprep.subr.mxu0 0.0
        %1200 = vmatpush1.msra.mxu0 0.0
        %1201 = vmatprep.subr.mxu0 0.0
        %1202 = vmatpush1.msra.mxu0 0.0
        %1203 = vmatprep.subr.mxu0 0.0
        %1204 = vmatpush1.msra.mxu0 0.0
        %1205 = vmatprep.subr.mxu0 0.0
        %1206 = vmatpush1.msra.mxu0 0.0
        %1207 = vmatprep.subr.mxu0 0.0
        %1208 = vmatpush1.msra.mxu0 0.0
        %1209 = vmatprep.subr.mxu0 0.0
        %1210 = vmatpush1.msra.mxu0 0.0
        %1211 = vmatprep.subr.mxu0 0.0
        %1212 = vmatpush1.msra.mxu0 0.0
        %1213 = vmatprep.subr.mxu0 0.0
        %1214 = vmatpush1.msra.mxu0 0.0
        %1215 = vmatprep.subr.mxu0 0.0
        %1216 = vmatpush1.msra.mxu0 0.0
        %1217 = vmatprep.mubr.f32.mxu0 0.0
        %1218 = vmatmul.mubr.f32.gmra.mrb[0].mxu0 %v1074
        %v1219 = vpop.f32.mrb[0].mxu0
        %v1220 = vadd.f32 %v1150, %v1219
        %v1221 = vpop.f32.mrb[0].mxu0
        %1222 = vdwg.mxu0
        %v1223 = vld [vmem:[%s7] sm:$0xff]
        %v1224 = vld [vmem:[%s7 + $0x8] sm:$0xff]
        %v1225 = vld [vmem:[%s7 + $0x10] sm:$0xff]
        %v1226 = vld [vmem:[%s7 + $0x18] sm:$0xff]
        %v1227 = vld [vmem:[%s7 + $0x20] sm:$0xff]
        %v1228 = vld [vmem:[%s7 + $0x28] sm:$0xff]
        %v1229 = vld [vmem:[%s7 + $0x30] sm:$0xff]
        %v1230 = vld [vmem:[%s7 + $0x38] sm:$0xff]
        %v1231 = vld [vmem:[%s7 + $0x40] sm:$0xff]
        %v1232 = vld [vmem:[%s7 + $0x48] sm:$0xff]
        %v1233 = vld [vmem:[%s7 + $0x50] sm:$0xff]
        %v1234 = vld [vmem:[%s7 + $0x58] sm:$0xff]
        %v1235 = vld [vmem:[%s7 + $0x60] sm:$0xff]
        %v1236 = vld [vmem:[%s7 + $0x68] sm:$0xff]
        %v1237 = vld [vmem:[%s7 + $0x70] sm:$0xff]
        %v1238 = vld [vmem:[%s7 + $0x78] sm:$0xff]
        %1239 = vmatprep.subr.mxu0 0.0
        %1240 = vmatpush1.msra.mxu0 %v1223
        %1241 = vmatprep.subr.mxu0 0.0
        %1242 = vmatpush1.msra.mxu0 %v1224
        %1243 = vmatprep.subr.mxu0 0.0
        %1244 = vmatpush1.msra.mxu0 %v1225
        %1245 = vmatprep.subr.mxu0 0.0
        %1246 = vmatpush1.msra.mxu0 %v1226
        %1247 = vmatprep.subr.mxu0 0.0
        %1248 = vmatpush1.msra.mxu0 %v1227
        %1249 = vmatprep.subr.mxu0 0.0
        %1250 = vmatpush1.msra.mxu0 %v1228
        %1251 = vmatprep.subr.mxu0 0.0
        %1252 = vmatpush1.msra.mxu0 %v1229
        %1253 = vmatprep.subr.mxu0 0.0
        %1254 = vmatpush1.msra.mxu0 %v1230
        %1255 = vmatprep.subr.mxu0 0.0
        %1256 = vmatpush1.msra.mxu0 %v1231
        %1257 = vmatprep.subr.mxu0 0.0
        %1258 = vmatpush1.msra.mxu0 %v1232
        %1259 = vmatprep.subr.mxu0 0.0
        %1260 = vmatpush1.msra.mxu0 %v1233
        %1261 = vmatprep.subr.mxu0 0.0
        %1262 = vmatpush1.msra.mxu0 %v1234
        %1263 = vmatprep.subr.mxu0 0.0
        %1264 = vmatpush1.msra.mxu0 %v1235
        %1265 = vmatprep.subr.mxu0 0.0
        %1266 = vmatpush1.msra.mxu0 %v1236
        %1267 = vmatprep.subr.mxu0 0.0
        %1268 = vmatpush1.msra.mxu0 %v1237
        %1269 = vmatprep.subr.mxu0 0.0
        %1270 = vmatpush1.msra.mxu0 %v1238
        %1271 = vmatprep.subr.mxu0 0.0
        %1272 = vmatpush1.msra.mxu0 0.0
        %1273 = vmatprep.subr.mxu0 0.0
        %1274 = vmatpush1.msra.mxu0 0.0
        %1275 = vmatprep.subr.mxu0 0.0
        %1276 = vmatpush1.msra.mxu0 0.0
        %1277 = vmatprep.subr.mxu0 0.0
        %1278 = vmatpush1.msra.mxu0 0.0
        %1279 = vmatprep.subr.mxu0 0.0
        %1280 = vmatpush1.msra.mxu0 0.0
        %1281 = vmatprep.subr.mxu0 0.0
        %1282 = vmatpush1.msra.mxu0 0.0
        %1283 = vmatprep.subr.mxu0 0.0
        %1284 = vmatpush1.msra.mxu0 0.0
        %1285 = vmatprep.subr.mxu0 0.0
        %1286 = vmatpush1.msra.mxu0 0.0
        %1287 = vmatprep.subr.mxu0 0.0
        %1288 = vmatpush1.msra.mxu0 0.0
        %1289 = vmatprep.subr.mxu0 0.0
        %1290 = vmatpush1.msra.mxu0 0.0
        %1291 = vmatprep.subr.mxu0 0.0
        %1292 = vmatpush1.msra.mxu0 0.0
        %1293 = vmatprep.subr.mxu0 0.0
        %1294 = vmatpush1.msra.mxu0 0.0
        %1295 = vmatprep.subr.mxu0 0.0
        %1296 = vmatpush1.msra.mxu0 0.0
        %1297 = vmatprep.subr.mxu0 0.0
        %1298 = vmatpush1.msra.mxu0 0.0
        %1299 = vmatprep.subr.mxu0 0.0
        %1300 = vmatpush1.msra.mxu0 0.0
        %1301 = vmatprep.subr.mxu0 0.0
        %1302 = vmatpush1.msra.mxu0 0.0
        %1303 = vmatprep.mubr.f32.mxu0 0.0
        %1304 = vmatmul.mubr.f32.gmra.mrb[0].mxu0 %v1220
        %v1305 = vpop.f32.mrb[0].mxu0
        %v1306 = vadd.f32 0.0, %v1305
        %v1307 = vpop.f32.mrb[0].mxu0
        %1308 = vdwg.mxu0
        %vm1309 = vcmask 1043458
        %v1310 = vsel %vm1309, %v1220, -inf
        %1311 = vmax.xlane.f32.xlu0 %v1310
        %v1312 = vpop.xlane.xlu0 %1311
        %v1313 = vmul.f32 %v1312, 3.5449078
        %vm1314 = vcmask 1024
        %v1315 = vsel %vm1314, %v1306, 0.0
        %1316 = vadd.xlane.f32.xlu0 %v1315
        %v1317 = vpop.xlane.xlu0 %1316
        %v1318 = vrot.slane %v1317, 4
        %v1319 = vadd.f32 %v1317, %v1318
        %v1320 = vrot.slane %v1319, 2
        %v1321 = vadd.f32 %v1319, %v1320
        %v1322 = vrot.slane %v1321, 1
        %v1323 = vadd.f32 %v1321, %v1322
        %s1324 = vtos %v1323
        %v1326 = vrot.slane %v1313, 2
        %v1328 = vsel %vm1314, %v1326, 0.0
        %1329 = vadd.xlane.f32.xlu0 %v1328
        %v1330 = vpop.xlane.xlu0 %1329
        %v1331 = vrot.slane %v1330, 4
        %v1332 = vadd.f32 %v1330, %v1331
        %v1333 = vrot.slane %v1332, 2
        %v1334 = vadd.f32 %v1332, %v1333
        %v1335 = vrot.slane %v1334, 1
        %v1336 = vadd.f32 %v1334, %v1335
        %s1337 = vtos %v1336
        %s1338 = sadd.f32 %s1324, %s1337
        %s1339 = smul.f32 %s1338, 3.5449078
        %s1340 = sadd.f32 %s1339, 1e-16
        %v1341 = vstv %s1340
        %v1342 = vrcp.pop %v1341
        %v1343 = vmul.f32 %v1306, %v1342
        %v1344 = vmul.f32 %v1313, %v1342
        %vm1345 = vcmask 121856
        %v1346 = vsel %vm1345, %v1343, 0.0
        %vm1347 = vcmask 7168
        %v1348 = vsel %vm1347, %v1344, 0.0
        %vm1349 = vcmask 1041408
        %v1350 = vsel %vm1349, %v1346, %v1348
        %1351 = vst [vmem:[%s311] sm:$0xf] %v1350
        %s1352 = sand.u32 %s204, 1
        %s1353 = scalar_lea.sflag [#allocation4], %s1352
        %s1354 = sand.u32 %s204, 1
        %s1355 = smul.addr %s1354, 4
        %s1356 = scalar_lea.vmem [#allocation5], %s1355
        // Predicated region
        $region57: #{tpu_custom_call.1} parent=51 // pred_check
          %p1357 = pneg %p214
        $region58: #{tpu_custom_call.1} parent=51 // pred_check_branch
          %1359 = sbr.rel (%p1357) target = $region60
        $region59: #{tpu_custom_call.1} parent=51 // pred_region
          %s1361 = ssub.s32 64, 64
          %1362 = vsyncadd %s1353, %s1361
          %s1363 = smul.addr %s23, 64
          %s1364 = scalar_lea.hbm %s8, %s1363
          %s1366 = sshll.u32 %s1356, 4
          %s1367 = int_to_ptr.vmem [resolvable:$true] %s1366
          %1369 = dma.vmem_to_hbm [thread:$0]  %s1367, 64, %s1364, %s1353
        $region60: #{tpu_custom_call.1} parent=51 // pred_fallthru
          _
      $region52: #{tpu_custom_call.1} parent=5 // pred_fallthru
        _
      %p1370 = scmp.le.s32.totalorder 2, %s18
      // Predicated region
      $region61: #{tpu_custom_call.1} parent=5 // pred_check
        %p1371 = pneg %p1370
      $region62: #{tpu_custom_call.1} parent=5 // pred_check_branch
        %1373 = sbr.rel (%p1371) target = $region64
      $region63: #{tpu_custom_call.1} parent=5 // pred_region
        %s1374 = ssub.s32 %s18, 2
        // Predicated region
        $region65: #{tpu_custom_call.1} parent=63 // pred_check
          %p1375 = pneg %p220
        $region66: #{tpu_custom_call.1} parent=63 // pred_check_branch
          %1377 = sbr.rel (%p1375) target = $region68
        $region67: #{tpu_custom_call.1} parent=63 // pred_region
          %s1378 = sand.u32 %s205, 1
          %s1379 = scalar_lea.sflag [#allocation4], %s1378
          %s1380 = sand.u32 %s205, 1
          %s1381 = smul.addr %s1380, 4
          %s1382 = scalar_lea.vmem [#allocation5], %s1381
          %1383 = dma.done %s1379, 64
        $region68: #{tpu_custom_call.1} parent=63 // pred_fallthru
          _
      $region64: #{tpu_custom_call.1} parent=5 // pred_fallthru
        _
    $region6: #{tpu_custom_call.1} parent=1 // loop_footer
      %s22 = sadd.s32 1, %s18
    $region7: #{tpu_custom_call.1} parent=1 // loop_footer_branch
      %17 = sbr.rel target = $region3
    $region8: #{tpu_custom_call.1} parent=1 // loop_exit
      _
    %1384 = vsyncpa [#allocation3], 1
    %s1385 = scalar_lea.sflag [#allocation3], 1
    %1386 = vsyncpa %s1385, 1
    %1387 = vsyncpa [#allocation4], 1
    %s1388 = scalar_lea.sflag [#allocation4], 1
    %1389 = vsyncpa %s1388, 1

</llo_original>
